<compile_context>
chip_gen: v5e
topology: v5e:2x2
jax: 0.10.0
libtpu: 0.0.40
codegen_flags: <defaults>
</compile_context>

<pallas_src>
import jax
import jax.numpy as jnp
from jax.experimental import pallas as pl
from jax.experimental.pallas import tpu as pltpu


def word2vec_kernel(idx_ref,      # (TB, 1) int32 class indices (VMEM tile)
                    ew1_ref,      # (E_pad, H1) compute dtype, VMEM-resident: emb @ W1[:D]
                    noise_ref,    # (TB, Nn) compute dtype
                    w1n_ref,      # (Nn, H1) compute dtype, resident (noise half of W1)
                    b1_ref,       # (1, H1)  f32
                    w2f_ref,      # (H1, H2) compute dtype, resident (W2 @ Wlt fused)
                    b2f_ref,      # (1, H2)  f32 (b2 @ Wlt fused)
                    out_ref):     # (TB, H2) f32
    tb = idx_ref.shape[0]
    e_pad = ew1_ref.shape[0]

    # In-register one-hot "gather" matrix: (TB, E_pad).  Built on the VPU from a
    # lane iota + compare; never touches HBM.  Multiplying it into the folded
    # (E_pad, H1) table on the MXU selects the per-row word contribution to
    # layer 1 exactly (1.0/0.0 are exact in every dtype).
    cls = jax.lax.broadcasted_iota(jnp.int32, (tb, e_pad), 1)
    onehot = (cls == idx_ref[...]).astype(ew1_ref.dtype)

    word_part = jnp.dot(onehot, ew1_ref[...],
                        preferred_element_type=jnp.float32)          # (TB, H1)
    noise_part = jnp.dot(noise_ref[...], w1n_ref[...],
                         preferred_element_type=jnp.float32)         # (TB, H1)

    # Layer 1: word half + noise half + bias, ReLU (all fp32).
    h1 = jnp.maximum(word_part + noise_part + b1_ref[...], 0.0)

    # Fused final linear + linear_transform: h1 @ (W2 @ Wlt) + (b2 @ Wlt).
    h2 = jnp.dot(h1.astype(w2f_ref.dtype), w2f_ref[...],
                 preferred_element_type=jnp.float32) + b2f_ref[...]
    out_ref[...] = h2.astype(out_ref.dtype)


def word2vec_forward(x_idx, noise, params, *, tile_b=128,
                     compute_dtype=jnp.float32):
    """Full Word2vec forward (eval mode) in a single batch-tiled Pallas kernel."""
    emb = params["emb"].astype(jnp.float32)        # (E, D)
    w1, b1 = params["w1"], params["b1"]            # (D+Nn, H1), (H1,)
    w2, b2 = params["w2"], params["b2"]            # (H1, H2),   (H2,)
    wlt = params.get("wlt", None)                  # (H2, H2) or None

    E, D = emb.shape
    B, Nn = noise.shape
    H1 = w1.shape[1]
    H2 = w2.shape[1]

    # ---- one-time algebraic pre-folds (exact linear maps, done in fp32) ----
    emb_w1 = jnp.dot(emb, w1[:D].astype(jnp.float32))        # (E, H1): word half folded into L1
    w1n = w1[D:].astype(jnp.float32)                          # (Nn, H1): noise half of L1
    if wlt is not None:
        w2f = jnp.dot(w2.astype(jnp.float32), wlt.astype(jnp.float32))   # (H1, H2)
        b2f = jnp.dot(b2.astype(jnp.float32), wlt.astype(jnp.float32))   # (H2,)
    else:
        w2f, b2f = w2.astype(jnp.float32), b2.astype(jnp.float32)

    # ---- pad vocab to a lane-dense multiple of 128 (zero rows, never selected) ----
    e_pad = ((E + 127) // 128) * 128
    if e_pad != E:
        emb_w1 = jnp.pad(emb_w1, ((0, e_pad - E), (0, 0)))

    # ---- batch padding to a whole number of tiles; clamp indices (safe select) ----
    nb = pl.cdiv(B, tile_b)
    b_pad = nb * tile_b
    x_idx = jnp.clip(x_idx, 0, E - 1).astype(jnp.int32).reshape(-1, 1)   # (B, 1)
    if b_pad != B:
        x_idx = jnp.pad(x_idx, ((0, b_pad - B), (0, 0)))
        noise = jnp.pad(noise, ((0, b_pad - B), (0, 0)))

    # ---- dtype plumbing: compute-dtype matmul operands, fp32 bias/accumulate ----
    ew1_c = emb_w1.astype(compute_dtype)
    noise_c = noise.astype(compute_dtype)
    w1n_c = w1n.astype(compute_dtype)
    w2f_c = w2f.astype(compute_dtype)
    b1_2d = b1.reshape(1, H1).astype(jnp.float32)
    b2f_2d = b2f.reshape(1, H2).astype(jnp.float32)

    grid_spec = pltpu.PrefetchScalarGridSpec(
        num_scalar_prefetch=0,
        grid=(nb,),
        in_specs=[
            pl.BlockSpec((tile_b, 1), lambda i: (i, 0)),       # class indices tile
            pl.BlockSpec((e_pad, H1), lambda i: (0, 0)),       # folded emb table (resident)
            pl.BlockSpec((tile_b, Nn), lambda i: (i, 0)),      # noise batch tile
            pl.BlockSpec((Nn, H1), lambda i: (0, 0)),          # W1 noise half (resident)
            pl.BlockSpec((1, H1), lambda i: (0, 0)),           # b1
            pl.BlockSpec((H1, H2), lambda i: (0, 0)),          # fused W2 @ Wlt (resident)
            pl.BlockSpec((1, H2), lambda i: (0, 0)),           # fused b2 @ Wlt
        ],
        out_specs=pl.BlockSpec((tile_b, H2), lambda i: (i, 0)),
    )

    out = pl.pallas_call(
        word2vec_kernel,
        grid_spec=grid_spec,
        out_shape=jax.ShapeDtypeStruct((b_pad, H2), jnp.float32),
        compiler_params=pltpu.CompilerParams(
            dimension_semantics=("parallel",)),                # batch tiles are independent
    )(x_idx, ew1_c, noise_c, w1n_c, b1_2d, w2f_c, b2f_2d)
    return out[:B]


def reference_forward(x_idx, noise, params):
    word = params["emb"][x_idx]
    h = jnp.concatenate([word, noise], axis=-1)
    h1 = jnp.maximum(h @ params["w1"] + params["b1"], 0.0)
    h2 = h1 @ params["w2"] + params["b2"]
    if params.get("wlt", None) is not None:
        h2 = h2 @ params["wlt"]
    return h2


if __name__ == "__main__":
    # Shapes consistent with the module (small class-count vocab, w2v-style 300-d
    # semantics), feature dims chosen lane-dense (multiples of 128):
    #   E classes, semantic_dim D, noise_dimension Nn, mlp_dims = [H1, H2]
    B, E, D, Nn, H1, H2 = 256, 500, 300, 128, 256, 128

    key = jax.random.PRNGKey(0)
    k_emb, k_x, k_noise, k_w1, k_b1, k_w2, k_b2, k_wlt = jax.random.split(key, 8)

    params = {
        "emb": jax.random.normal(k_emb, (E, D), jnp.float32),
        "w1":  jax.random.normal(k_w1, (D + Nn, H1), jnp.float32) * 0.05,
        "b1":  jax.random.normal(k_b1, (H1,), jnp.float32) * 0.01,
        "w2":  jax.random.normal(k_w2, (H1, H2), jnp.float32) * 0.05,
        "b2":  jax.random.normal(k_b2, (H2,), jnp.float32) * 0.01,
        "wlt": jax.random.normal(k_wlt, (H2, H2), jnp.float32) * 0.05,
    }

    x_idx = jax.random.randint(k_x, (B,), 0, E)                  # class indices
    noise = jax.random.normal(k_noise, (B, Nn), jnp.float32)     # noise_type='normal'

    ref = reference_forward(x_idx, noise, params)

    # fp32 path: exact-semantics check against the JAX reference.
    out32 = jax.block_until_ready(
        word2vec_forward(x_idx, noise, params, compute_dtype=jnp.float32))
    assert out32.shape == (B, H2)
    assert jnp.allclose(out32, ref, atol=1e-3, rtol=1e-3), "fp32 mismatch vs reference"

    # bf16 path (v6e/v7x recommendation): bf16 matmuls, fp32 accumulation.
    out_bf = jax.block_until_ready(
        word2vec_forward(x_idx, noise, params, compute_dtype=jnp.bfloat16))
    assert out_bf.shape == (B, H2)
    assert float(jnp.max(jnp.abs(out_bf - ref))) < 5e-2, "bf16 path drifted too far"

    print("KERNEL_OK")
</pallas_src>

<mosaic_0001>
module attributes {stable_mosaic.version = 11 : i64} {
  func.func @word2vec_kernel(%arg0: i32, %arg1: memref<128x1xi32, #tpu.memory_space<vmem>>, %arg2: memref<512x256xf32, #tpu.memory_space<vmem>>, %arg3: memref<128x128xf32, #tpu.memory_space<vmem>>, %arg4: memref<128x256xf32, #tpu.memory_space<vmem>>, %arg5: memref<1x256xf32, #tpu.memory_space<vmem>>, %arg6: memref<256x128xf32, #tpu.memory_space<vmem>>, %arg7: memref<1x128xf32, #tpu.memory_space<vmem>>, %arg8: memref<128x128xf32, #tpu.memory_space<vmem>>) attributes {dimension_semantics = [#tpu.dimension_semantics<parallel>], iteration_bounds = array<i64: 2>, scalar_prefetch = 0 : i64, scratch_operands = 0 : i64, tpu.core_type = #tpu.core_type<tc>, window_params = [{transform_indices = @transform_0, window_bounds = array<i64: 128, 1>}, {pipeline_mode = #tpu.pipeline_mode<synchronous>, transform_indices = @transform_1, window_bounds = array<i64: 512, 256>}, {transform_indices = @transform_2, window_bounds = array<i64: 128, 128>}, {pipeline_mode = #tpu.pipeline_mode<synchronous>, transform_indices = @transform_3, window_bounds = array<i64: 128, 256>}, {pipeline_mode = #tpu.pipeline_mode<synchronous>, transform_indices = @transform_4, window_bounds = array<i64: 1, 256>}, {pipeline_mode = #tpu.pipeline_mode<synchronous>, transform_indices = @transform_5, window_bounds = array<i64: 256, 128>}, {pipeline_mode = #tpu.pipeline_mode<synchronous>, transform_indices = @transform_6, window_bounds = array<i64: 1, 128>}, {transform_indices = @transform_7, window_bounds = array<i64: 128, 128>}]} {
    %0 = tpu.iota {dimensions = array<i32: 1>} : vector<128x512xi32>
    %c0 = arith.constant 0 : index
    %c0_0 = arith.constant 0 : index
    %1 = vector.load %arg1[%c0, %c0_0] : memref<128x1xi32, #tpu.memory_space<vmem>>, vector<128x1xi32>
    %2 = vector.broadcast %1 : vector<128x1xi32> to vector<128x512xi32>
    %3 = arith.cmpi eq, %0, %2 : vector<128x512xi32>
    %4 = arith.extui %3 : vector<128x512xi1> to vector<128x512xi32>
    %5 = arith.sitofp %4 : vector<128x512xi32> to vector<128x512xf32>
    %c0_1 = arith.constant 0 : index
    %c0_2 = arith.constant 0 : index
    %6 = vector.load %arg2[%c0_1, %c0_2] : memref<512x256xf32, #tpu.memory_space<vmem>>, vector<512x256xf32>
    %cst = arith.constant dense<0.000000e+00> : vector<128x256xf32>
    %7 = tpu.matmul %5, %6, %cst {dimension_numbers = #tpu.dot_dimension_numbers<[1], [0], [0], [1], [0, 0, 1, 1], [], []>} : vector<128x512xf32>, vector<512x256xf32>, vector<128x256xf32> -> vector<128x256xf32>
    %c0_3 = arith.constant 0 : index
    %c0_4 = arith.constant 0 : index
    %8 = vector.load %arg3[%c0_3, %c0_4] : memref<128x128xf32, #tpu.memory_space<vmem>>, vector<128x128xf32>
    %c0_5 = arith.constant 0 : index
    %c0_6 = arith.constant 0 : index
    %9 = vector.load %arg4[%c0_5, %c0_6] : memref<128x256xf32, #tpu.memory_space<vmem>>, vector<128x256xf32>
    %cst_7 = arith.constant dense<0.000000e+00> : vector<128x256xf32>
    %10 = tpu.matmul %8, %9, %cst_7 {dimension_numbers = #tpu.dot_dimension_numbers<[1], [0], [0], [1], [0, 0, 1, 1], [], []>} : vector<128x128xf32>, vector<128x256xf32>, vector<128x256xf32> -> vector<128x256xf32>
    %11 = arith.addf %7, %10 : vector<128x256xf32>
    %c0_8 = arith.constant 0 : index
    %c0_9 = arith.constant 0 : index
    %12 = vector.load %arg5[%c0_8, %c0_9] : memref<1x256xf32, #tpu.memory_space<vmem>>, vector<1x256xf32>
    %13 = vector.broadcast %12 : vector<1x256xf32> to vector<128x256xf32>
    %14 = arith.addf %11, %13 : vector<128x256xf32>
    %cst_10 = arith.constant 0.000000e+00 : f32
    %15 = vector.broadcast %cst_10 : f32 to vector<128x256xf32>
    %16 = arith.maximumf %14, %15 : vector<128x256xf32>
    %c0_11 = arith.constant 0 : index
    %c0_12 = arith.constant 0 : index
    %17 = vector.load %arg6[%c0_11, %c0_12] : memref<256x128xf32, #tpu.memory_space<vmem>>, vector<256x128xf32>
    %cst_13 = arith.constant dense<0.000000e+00> : vector<128x128xf32>
    %18 = tpu.matmul %16, %17, %cst_13 {dimension_numbers = #tpu.dot_dimension_numbers<[1], [0], [0], [1], [0, 0, 1, 1], [], []>} : vector<128x256xf32>, vector<256x128xf32>, vector<128x128xf32> -> vector<128x128xf32>
    %c0_14 = arith.constant 0 : index
    %c0_15 = arith.constant 0 : index
    %19 = vector.load %arg7[%c0_14, %c0_15] : memref<1x128xf32, #tpu.memory_space<vmem>>, vector<1x128xf32>
    %20 = vector.broadcast %19 : vector<1x128xf32> to vector<128x128xf32>
    %21 = arith.addf %18, %20 : vector<128x128xf32>
    %c0_16 = arith.constant 0 : index
    %c0_17 = arith.constant 0 : index
    %22 = vector.load %arg8[%c0_16, %c0_17] : memref<128x128xf32, #tpu.memory_space<vmem>>, vector<128x128xf32>
    tpu.vector_store %arg8[%c0_16, %c0_17], %21 {strides = array<i32>} : memref<128x128xf32, #tpu.memory_space<vmem>>, vector<128x128xf32>,
    return
  }
  func.func @transform_0(%arg0: i32) -> (i32, i32) {
    %c0_i32 = arith.constant 0 : i32
    %c0_i32_0 = arith.constant 0 : i32
    return %arg0, %c0_i32 : i32, i32
  }
  func.func @transform_1(%arg0: i32) -> (i32, i32) {
    %c0_i32 = arith.constant 0 : i32
    %c0_i32_0 = arith.constant 0 : i32
    %c0_i32_1 = arith.constant 0 : i32
    return %c0_i32, %c0_i32_0 : i32, i32
  }
  func.func @transform_2(%arg0: i32) -> (i32, i32) {
    %c0_i32 = arith.constant 0 : i32
    %c0_i32_0 = arith.constant 0 : i32
    return %arg0, %c0_i32 : i32, i32
  }
  func.func @transform_3(%arg0: i32) -> (i32, i32) {
    %c0_i32 = arith.constant 0 : i32
    %c0_i32_0 = arith.constant 0 : i32
    %c0_i32_1 = arith.constant 0 : i32
    return %c0_i32, %c0_i32_0 : i32, i32
  }
  func.func @transform_4(%arg0: i32) -> (i32, i32) {
    %c0_i32 = arith.constant 0 : i32
    %c0_i32_0 = arith.constant 0 : i32
    %c0_i32_1 = arith.constant 0 : i32
    return %c0_i32, %c0_i32_0 : i32, i32
  }
  func.func @transform_5(%arg0: i32) -> (i32, i32) {
    %c0_i32 = arith.constant 0 : i32
    %c0_i32_0 = arith.constant 0 : i32
    %c0_i32_1 = arith.constant 0 : i32
    return %c0_i32, %c0_i32_0 : i32, i32
  }
  func.func @transform_6(%arg0: i32) -> (i32, i32) {
    %c0_i32 = arith.constant 0 : i32
    %c0_i32_0 = arith.constant 0 : i32
    %c0_i32_1 = arith.constant 0 : i32
    return %c0_i32, %c0_i32_0 : i32, i32
  }
  func.func @transform_7(%arg0: i32) -> (i32, i32) {
    %c0_i32 = arith.constant 0 : i32
    %c0_i32_0 = arith.constant 0 : i32
    return %arg0, %c0_i32 : i32, i32
  }
}

</mosaic_0001>

<llo_original>
// kernel: tpu_custom_call.1
$region0: #{tpu_custom_call.1}
  #allocation0 [shape = 'u32[]', space=smem, size = 0x4, offset = 0x4, fixed_abs, tag = 'smem constant byte address 0x4 - core index']
  #allocation1 [shape = 'u32[72,128]{1,0:T(1,128)}', space=vmem, size = 0x9000, scoped, tag = 'internal scratch']
  %s0 = inlined_call_operand.vmem [shape: s32[256,1], index: 0, kind: input, shape index: {}]
  %s1 = inlined_call_operand.hbm [shape: f32[512,256], index: 1, kind: input, shape index: {}]
  %s2 = inlined_call_operand.vmem [shape: f32[256,128], index: 2, kind: input, shape index: {}]
  %s3 = inlined_call_operand.hbm [shape: f32[128,256], index: 3, kind: input, shape index: {}]
  %s4 = inlined_call_operand.vmem [shape: f32[1,256], index: 4, kind: input, shape index: {}]
  %s5 = inlined_call_operand.hbm [shape: f32[256,128], index: 5, kind: input, shape index: {}]
  %s6 = inlined_call_operand.vmem [shape: f32[1,128], index: 6, kind: input, shape index: {}]
  %s7 = inlined_call_operand.hbm [shape: f32[256,128], index: 7, kind: output, shape index: {}]
  %s8 = sld [smem:[#allocation0]]
  $region73: #{tpu_custom_call.1} parent=0
    _
  %s10 = ssub.s32 1, %s8
  %s11 = scalar_select 0, %s10, %s8
  $region1: #{tpu_custom_call.1} parent=0
    #allocation2 [shape = 'u8[524288]{0}', space=vmem, size = 0x80000, scoped, tag = 'input window, operand 1, single buffered']
    #allocation3 [shape = 's32[2]{0}', space=sflag, size = 0x8, scoped, tag = 'scoped memory for tpu_custom_call.1']
    #allocation4 [shape = 's32[2]{0}', space=sflag, size = 0x8, scoped, tag = 'scoped memory for tpu_custom_call.1']
    #allocation5 [shape = 'u8[131072]{0}', space=vmem, size = 0x20000, scoped, tag = 'input window, operand 3, single buffered']
    #allocation6 [shape = 's32[1]{0}', space=sflag, size = 0x4, scoped, tag = 'scoped memory for tpu_custom_call.1']
    #allocation7 [shape = 'u8[131072]{0}', space=vmem, size = 0x20000, scoped, tag = 'input window, operand 5, single buffered']
    #allocation8 [shape = 'u8[131072]{0}', space=vmem, size = 0x20000, scoped, tag = 'output window, operand 0']
    %12 = vsyncpa [#allocation3], 0
    %13 = vsyncpa [#allocation6], 0
    %14 = vsyncpa [#allocation4], 0
    %s15 = scalar_lea.sflag [#allocation4], 1
    %16 = vsyncpa %s15, 0
    loop: start=0, step=1, limit=4
    $region2: #{tpu_custom_call.1} parent=1 // loop_pre_header
      _
    $region3: #{tpu_custom_call.1} parent=1 // loop_header
      %s18 = sphi 0, %s22
      %p19 = scmp.ge.s32.totalorder %s18, 4
      %s28 = sphi 0, %s30
      %s31 = sphi 0, %s28
      %s32 = sphi 0, %s31
      %s48 = sphi 0, %s32
      %s52 = sphi 0, %s52
      %s54 = sphi 0, %s52
      %s55 = sphi 0, %s54
      %s69 = sphi 0, %s55
      %s75 = sphi 0, %s77
      %s78 = sphi 0, %s75
      %s79 = sphi 0, %s78
      %s95 = sphi 0, %s79
      %s99 = sphi 0, %s99
      %s101 = sphi 0, %s99
      %s102 = sphi 0, %s101
      %s116 = sphi 0, %s102
      %s120 = sphi 0, %s120
      %s122 = sphi 0, %s120
      %s123 = sphi 0, %s122
      %s137 = sphi 0, %s123
      %s141 = sphi 0, %s141
      %s143 = sphi 0, %s141
      %s144 = sphi 0, %s143
      %s158 = sphi 0, %s144
      %s162 = sphi 0, %s162
      %s164 = sphi 0, %s162
      %s165 = sphi 0, %s164
      %s179 = sphi 0, %s165
      %s185 = sphi 0, %s187
      %s188 = sphi 0, %s185
      %s189 = sphi 0, %s188
      %s205 = sphi 0, %s189
    $region4: #{tpu_custom_call.1} parent=1 // loop_header_branch
      %21 = sbr.rel (%p19) target = $region8
    $region5: #{tpu_custom_call.1} parent=1 // loop_body
      %s23 = ssub.s32 %s18, 1
      %s24 = ssub.s32 %s18, 2
      %s25 = sadd.s32 %s18, 1
      %s26 = ssub.s32 %s18, %s25
      %p27 = scmp.eq.s32.totalorder %s26, 0
      %s29 = sadd.s32 %s28, 1
      %s30 = scalar_select %p27, %s28, %s29
      %p33 = pneg %p27
      %p34 = scmp.eq.s32.totalorder %s18, 1
      %p35 = por %p33, %p34
      %p36 = scmp.ne.s32.totalorder %s28, %s31
      %p37 = scmp.eq.s32.totalorder %s18, 0
      %p38 = por %p36, %p37
      %p39 = scmp.ne.s32.totalorder %s28, %s31
      %p40 = scmp.eq.s32.totalorder %s23, 1
      %p41 = por %p39, %p40
      %p42 = scmp.ne.s32.totalorder %s31, %s32
      %p43 = scmp.eq.s32.totalorder %s23, 0
      %p44 = por %p42, %p43
      %p45 = scmp.ne.s32.totalorder %s31, %s32
      %p46 = scmp.eq.s32.totalorder %s24, 1
      %p47 = por %p45, %p46
      %p49 = scmp.ne.s32.totalorder %s32, %s48
      %p50 = scmp.eq.s32.totalorder %s24, 0
      %p51 = por %p49, %p50
      %s53 = sadd.s32 %s52, 1
      %p56 = scmp.eq.s32.totalorder %s18, 1
      %p57 = scmp.ne.s32.totalorder %s52, %s54
      %p58 = scmp.eq.s32.totalorder %s18, 0
      %p59 = por %p57, %p58
      %p60 = scmp.ne.s32.totalorder %s52, %s54
      %p61 = scmp.eq.s32.totalorder %s23, 1
      %p62 = por %p60, %p61
      %p63 = scmp.ne.s32.totalorder %s54, %s55
      %p64 = scmp.eq.s32.totalorder %s23, 0
      %p65 = por %p63, %p64
      %p66 = scmp.ne.s32.totalorder %s54, %s55
      %p67 = scmp.eq.s32.totalorder %s24, 1
      %p68 = por %p66, %p67
      %p70 = scmp.ne.s32.totalorder %s55, %s69
      %p71 = scmp.eq.s32.totalorder %s24, 0
      %p72 = por %p70, %p71
      %s73 = ssub.s32 %s18, %s25
      %p74 = scmp.eq.s32.totalorder %s73, 0
      %s76 = sadd.s32 %s75, 1
      %s77 = scalar_select %p74, %s75, %s76
      %p80 = pneg %p74
      %p81 = scmp.eq.s32.totalorder %s18, 1
      %p82 = por %p80, %p81
      %p83 = scmp.ne.s32.totalorder %s75, %s78
      %p84 = scmp.eq.s32.totalorder %s18, 0
      %p85 = por %p83, %p84
      %p86 = scmp.ne.s32.totalorder %s75, %s78
      %p87 = scmp.eq.s32.totalorder %s23, 1
      %p88 = por %p86, %p87
      %p89 = scmp.ne.s32.totalorder %s78, %s79
      %p90 = scmp.eq.s32.totalorder %s23, 0
      %p91 = por %p89, %p90
      %p92 = scmp.ne.s32.totalorder %s78, %s79
      %p93 = scmp.eq.s32.totalorder %s24, 1
      %p94 = por %p92, %p93
      %p96 = scmp.ne.s32.totalorder %s79, %s95
      %p97 = scmp.eq.s32.totalorder %s24, 0
      %p98 = por %p96, %p97
      %s100 = sadd.s32 %s99, 1
      %p103 = scmp.eq.s32.totalorder %s18, 1
      %p104 = scmp.ne.s32.totalorder %s99, %s101
      %p105 = scmp.eq.s32.totalorder %s18, 0
      %p106 = por %p104, %p105
      %p107 = scmp.ne.s32.totalorder %s99, %s101
      %p108 = scmp.eq.s32.totalorder %s23, 1
      %p109 = por %p107, %p108
      %p110 = scmp.ne.s32.totalorder %s101, %s102
      %p111 = scmp.eq.s32.totalorder %s23, 0
      %p112 = por %p110, %p111
      %p113 = scmp.ne.s32.totalorder %s101, %s102
      %p114 = scmp.eq.s32.totalorder %s24, 1
      %p115 = por %p113, %p114
      %p117 = scmp.ne.s32.totalorder %s102, %s116
      %p118 = scmp.eq.s32.totalorder %s24, 0
      %p119 = por %p117, %p118
      %s121 = sadd.s32 %s120, 1
      %p124 = scmp.eq.s32.totalorder %s18, 1
      %p125 = scmp.ne.s32.totalorder %s120, %s122
      %p126 = scmp.eq.s32.totalorder %s18, 0
      %p127 = por %p125, %p126
      %p128 = scmp.ne.s32.totalorder %s120, %s122
      %p129 = scmp.eq.s32.totalorder %s23, 1
      %p130 = por %p128, %p129
      %p131 = scmp.ne.s32.totalorder %s122, %s123
      %p132 = scmp.eq.s32.totalorder %s23, 0
      %p133 = por %p131, %p132
      %p134 = scmp.ne.s32.totalorder %s122, %s123
      %p135 = scmp.eq.s32.totalorder %s24, 1
      %p136 = por %p134, %p135
      %p138 = scmp.ne.s32.totalorder %s123, %s137
      %p139 = scmp.eq.s32.totalorder %s24, 0
      %p140 = por %p138, %p139
      %s142 = sadd.s32 %s141, 1
      %p145 = scmp.eq.s32.totalorder %s18, 1
      %p146 = scmp.ne.s32.totalorder %s141, %s143
      %p147 = scmp.eq.s32.totalorder %s18, 0
      %p148 = por %p146, %p147
      %p149 = scmp.ne.s32.totalorder %s141, %s143
      %p150 = scmp.eq.s32.totalorder %s23, 1
      %p151 = por %p149, %p150
      %p152 = scmp.ne.s32.totalorder %s143, %s144
      %p153 = scmp.eq.s32.totalorder %s23, 0
      %p154 = por %p152, %p153
      %p155 = scmp.ne.s32.totalorder %s143, %s144
      %p156 = scmp.eq.s32.totalorder %s24, 1
      %p157 = por %p155, %p156
      %p159 = scmp.ne.s32.totalorder %s144, %s158
      %p160 = scmp.eq.s32.totalorder %s24, 0
      %p161 = por %p159, %p160
      %s163 = sadd.s32 %s162, 1
      %p166 = scmp.eq.s32.totalorder %s18, 1
      %p167 = scmp.ne.s32.totalorder %s162, %s164
      %p168 = scmp.eq.s32.totalorder %s18, 0
      %p169 = por %p167, %p168
      %p170 = scmp.ne.s32.totalorder %s162, %s164
      %p171 = scmp.eq.s32.totalorder %s23, 1
      %p172 = por %p170, %p171
      %p173 = scmp.ne.s32.totalorder %s164, %s165
      %p174 = scmp.eq.s32.totalorder %s23, 0
      %p175 = por %p173, %p174
      %p176 = scmp.ne.s32.totalorder %s164, %s165
      %p177 = scmp.eq.s32.totalorder %s24, 1
      %p178 = por %p176, %p177
      %p180 = scmp.ne.s32.totalorder %s165, %s179
      %p181 = scmp.eq.s32.totalorder %s24, 0
      %p182 = por %p180, %p181
      %s183 = ssub.s32 %s18, %s25
      %p184 = scmp.eq.s32.totalorder %s183, 0
      %s186 = sadd.s32 %s185, 1
      %s187 = scalar_select %p184, %s185, %s186
      %p190 = pneg %p184
      %p191 = scmp.eq.s32.totalorder %s18, 1
      %p192 = por %p190, %p191
      %p193 = scmp.ne.s32.totalorder %s185, %s188
      %p194 = scmp.eq.s32.totalorder %s18, 0
      %p195 = por %p193, %p194
      %p196 = scmp.ne.s32.totalorder %s185, %s188
      %p197 = scmp.eq.s32.totalorder %s23, 1
      %p198 = por %p196, %p197
      %p199 = scmp.ne.s32.totalorder %s188, %s189
      %p200 = scmp.eq.s32.totalorder %s23, 0
      %p201 = por %p199, %p200
      %p202 = scmp.ne.s32.totalorder %s188, %s189
      %p203 = scmp.eq.s32.totalorder %s24, 1
      %p204 = por %p202, %p203
      %p206 = scmp.ne.s32.totalorder %s189, %s205
      %p207 = scmp.eq.s32.totalorder %s24, 0
      %p208 = por %p206, %p207
      %p209 = scmp.le.s32.totalorder 1, %s18
      %p210 = scmp.lt.s32.totalorder %s18, 3
      %p211 = pnand %p209, %p210
      %p212 = pneg %p211
      // Predicated region
      $region9: #{tpu_custom_call.1} parent=5 // pred_check
        _
      $region10: #{tpu_custom_call.1} parent=5 // pred_check_branch
        %214 = sbr.rel (%p211) target = $region12
      $region11: #{tpu_custom_call.1} parent=5 // pred_region
        %s215 = ssub.s32 %s18, 1
        // Predicated region
        $region13: #{tpu_custom_call.1} parent=11 // pred_check
          %p216 = pneg %p65
        $region14: #{tpu_custom_call.1} parent=11 // pred_check_branch
          %218 = sbr.rel (%p216) target = $region16
        $region15: #{tpu_custom_call.1} parent=11 // pred_region
          %220 = vsyncadd [#allocation3], 0
          %s221 = sshll.u32 %s1, 4
          %s222 = int_to_ptr.hbm [resolvable:$true] %s221
          %s223 = sshll.u32 [#allocation2], 4
          %s224 = int_to_ptr.vmem [resolvable:$true] %s223
          %229 = dma.hbm_to_vmem [thread:$0]  %s222, 16384, %s224, [#allocation3], 256, 256, 16
        $region16: #{tpu_custom_call.1} parent=11 // pred_fallthru
          _
        // Predicated region
        $region17: #{tpu_custom_call.1} parent=11 // pred_check
          %p230 = pneg %p112
        $region18: #{tpu_custom_call.1} parent=11 // pred_check_branch
          %232 = sbr.rel (%p230) target = $region20
        $region19: #{tpu_custom_call.1} parent=11 // pred_region
          %234 = vsyncadd [#allocation6], 0
          %s235 = sshll.u32 %s3, 4
          %s236 = int_to_ptr.hbm [resolvable:$true] %s235
          %s237 = sshll.u32 [#allocation5], 4
          %s238 = int_to_ptr.vmem [resolvable:$true] %s237
          %243 = dma.hbm_to_vmem [thread:$0]  %s236, 4096, %s238, [#allocation6], 256, 256, 16
        $region20: #{tpu_custom_call.1} parent=11 // pred_fallthru
          _
        // Predicated region
        $region21: #{tpu_custom_call.1} parent=11 // pred_check
          %p244 = pneg %p133
        $region22: #{tpu_custom_call.1} parent=11 // pred_check_branch
          %246 = sbr.rel (%p244) target = $region24
        $region23: #{tpu_custom_call.1} parent=11 // pred_region
          _
        $region24: #{tpu_custom_call.1} parent=11 // pred_fallthru
          _
        // Predicated region
        $region25: #{tpu_custom_call.1} parent=11 // pred_check
          %p247 = pneg %p154
        $region26: #{tpu_custom_call.1} parent=11 // pred_check_branch
          %249 = sbr.rel (%p247) target = $region28
        $region27: #{tpu_custom_call.1} parent=11 // pred_region
          %251 = vsyncadd [#allocation6], 0
          %s252 = sshll.u32 %s5, 4
          %s253 = int_to_ptr.hbm [resolvable:$true] %s252
          %s254 = sshll.u32 [#allocation7], 4
          %s255 = int_to_ptr.vmem [resolvable:$true] %s254
          %260 = dma.hbm_to_vmem [thread:$0]  %s253, 4096, %s255, [#allocation6], 128, 128, 8
        $region28: #{tpu_custom_call.1} parent=11 // pred_fallthru
          _
        // Predicated region
        $region29: #{tpu_custom_call.1} parent=11 // pred_check
          %p261 = pneg %p175
        $region30: #{tpu_custom_call.1} parent=11 // pred_check_branch
          %263 = sbr.rel (%p261) target = $region32
        $region31: #{tpu_custom_call.1} parent=11 // pred_region
          _
        $region32: #{tpu_custom_call.1} parent=11 // pred_fallthru
          _
      $region12: #{tpu_custom_call.1} parent=5 // pred_fallthru
        _
      %p264 = scmp.lt.s32.totalorder %s18, 2
      // Predicated region
      $region33: #{tpu_custom_call.1} parent=5 // pred_check
        %p265 = pneg %p264
      $region34: #{tpu_custom_call.1} parent=5 // pred_check_branch
        %267 = sbr.rel (%p265) target = $region36
      $region35: #{tpu_custom_call.1} parent=5 // pred_region
        // Predicated region
        $region37: #{tpu_custom_call.1} parent=35 // pred_check
          %p268 = pneg %p38
        $region38: #{tpu_custom_call.1} parent=35 // pred_check_branch
          %270 = sbr.rel (%p268) target = $region40
        $region39: #{tpu_custom_call.1} parent=35 // pred_region
          %s271 = smul.u32 16, %s18
          %p272 = scmp.lt.s32.totalorder %s271, 31
          %s273 = scalar_select %p272, %s271, 31
          %s274 = smul.addr %s273, 8
          %s275 = scalar_lea.vmem %s0, %s274
          %s276 = smul.u32 16, %s18
        $region40: #{tpu_custom_call.1} parent=35 // pred_fallthru
          _
        // Predicated region
        $region41: #{tpu_custom_call.1} parent=35 // pred_check
          %p277 = pneg %p85
        $region42: #{tpu_custom_call.1} parent=35 // pred_check_branch
          %279 = sbr.rel (%p277) target = $region44
        $region43: #{tpu_custom_call.1} parent=35 // pred_region
          %s280 = smul.u32 16, %s18
          %p281 = scmp.lt.s32.totalorder %s280, 31
          %s282 = scalar_select %p281, %s280, 31
          %s283 = smul.addr %s282, 8
          %s284 = scalar_lea.vmem %s2, %s283
          %s285 = smul.u32 16, %s18
        $region44: #{tpu_custom_call.1} parent=35 // pred_fallthru
          _
      $region36: #{tpu_custom_call.1} parent=5 // pred_fallthru
        _
      %p286 = scmp.le.s32.totalorder 1, %s18
      %p287 = scmp.lt.s32.totalorder %s18, 3
      %p288 = pnand %p286, %p287
      %p289 = pneg %p288
      // Predicated region
      $region45: #{tpu_custom_call.1} parent=5 // pred_check
        _
      $region46: #{tpu_custom_call.1} parent=5 // pred_check_branch
        %291 = sbr.rel (%p288) target = $region48
      $region47: #{tpu_custom_call.1} parent=5 // pred_region
        %s292 = ssub.s32 %s18, 1
        // Predicated region
        $region49: #{tpu_custom_call.1} parent=47 // pred_check
          %p293 = pneg %p65
        $region50: #{tpu_custom_call.1} parent=47 // pred_check_branch
          %295 = sbr.rel (%p293) target = $region52
        $region51: #{tpu_custom_call.1} parent=47 // pred_region
          %297 = dma.done [#allocation3], 16384
        $region52: #{tpu_custom_call.1} parent=47 // pred_fallthru
          _
        // Predicated region
        $region53: #{tpu_custom_call.1} parent=47 // pred_check
          %p298 = pneg %p112
        $region54: #{tpu_custom_call.1} parent=47 // pred_check_branch
          %300 = sbr.rel (%p298) target = $region56
        $region55: #{tpu_custom_call.1} parent=47 // pred_region
          %302 = dma.done [#allocation6], 4096
        $region56: #{tpu_custom_call.1} parent=47 // pred_fallthru
          _
        // Predicated region
        $region57: #{tpu_custom_call.1} parent=47 // pred_check
          %p303 = pneg %p154
        $region58: #{tpu_custom_call.1} parent=47 // pred_check_branch
          %305 = sbr.rel (%p303) target = $region60
        $region59: #{tpu_custom_call.1} parent=47 // pred_region
          %307 = dma.done [#allocation6], 4096
        $region60: #{tpu_custom_call.1} parent=47 // pred_fallthru
          _
        %s308 = smul.u32 16, %s23
        %p309 = scmp.lt.s32.totalorder %s308, 31
        %s310 = scalar_select %p309, %s308, 31
        %s311 = smul.addr %s310, 8
        %s312 = scalar_lea.vmem %s0, %s311
        %p313 = pneg %p44
        %p314 = pneg %p41
        %p315 = pneg %p65
        %p316 = pneg %p62
        %s317 = smul.u32 16, %s23
        %p318 = scmp.lt.s32.totalorder %s317, 31
        %s319 = scalar_select %p318, %s317, 31
        %s320 = smul.addr %s319, 8
        %s321 = scalar_lea.vmem %s2, %s320
        %p322 = pneg %p91
        %p323 = pneg %p88
        %p324 = pneg %p112
        %p325 = pneg %p109
        %p326 = pneg %p133
        %p327 = pneg %p130
        %p328 = pneg %p154
        %p329 = pneg %p151
        %p330 = pneg %p175
        %p331 = pneg %p172
        %p332 = pneg %p201
        %p333 = pneg %p198
        %s334 = sand.u32 %s188, 1
        %s335 = scalar_lea.sflag [#allocation4], %s334
        %s336 = sand.u32 %s188, 1
        %s337 = smul.addr %s336, 128
        %s338 = scalar_lea.vmem [#allocation8], %s337
        %s339 = smul.u32 16, %s23
        %p340 = scmp.lt.s32.totalorder %s339, 31
        %s341 = scalar_select %p340, %s339, 31
        %s342 = smul.addr %s341, 8
        %s343 = scalar_lea.vmem %s0, %s342
        %s344 = smul.u32 16, %s23
        %s345 = smul.u32 16, %s23
        %p346 = scmp.lt.s32.totalorder %s345, 31
        %s347 = scalar_select %p346, %s345, 31
        %s348 = smul.addr %s347, 8
        %s349 = scalar_lea.vmem %s2, %s348
        %s350 = smul.u32 16, %s23
        %s351 = smul.u32 16, %s23
        %v352 = vlaneseq
        %v353 = vand.u32 %v352, 127
        %v354 = vadd.s32 %v353, 128
        %v355 = vadd.s32 %v353, 256
        %v356 = vadd.s32 %v353, 384
        %v357 = vld [vmem:[%s343] sm:$0xff]
        %v358 = vld [vmem:[%s343 + $0x8] sm:$0xff]
        %v359 = vld [vmem:[%s343 + $0x10] sm:$0xff]
        %v360 = vld [vmem:[%s343 + $0x18] sm:$0xff]
        %v361 = vld [vmem:[%s343 + $0x20] sm:$0xff]
        %v362 = vld [vmem:[%s343 + $0x28] sm:$0xff]
        %v363 = vld [vmem:[%s343 + $0x30] sm:$0xff]
        %v364 = vld [vmem:[%s343 + $0x38] sm:$0xff]
        %v365 = vld [vmem:[%s343 + $0x40] sm:$0xff]
        %v366 = vld [vmem:[%s343 + $0x48] sm:$0xff]
        %v367 = vld [vmem:[%s343 + $0x50] sm:$0xff]
        %v368 = vld [vmem:[%s343 + $0x58] sm:$0xff]
        %v369 = vld [vmem:[%s343 + $0x60] sm:$0xff]
        %v370 = vld [vmem:[%s343 + $0x68] sm:$0xff]
        %v371 = vld [vmem:[%s343 + $0x70] sm:$0xff]
        %v372 = vld [vmem:[%s343 + $0x78] sm:$0xff]
        %373 = vset.pattern.permute.xlu0 0
        %374 = vperm.xlu0 %373, %v357
        %v375 = vpop.permute.xlu0 %374
        %376 = vset.pattern.permute.xlu0 0
        %377 = vperm.xlu0 %376, %v358
        %v378 = vpop.permute.xlu0 %377
        %379 = vset.pattern.permute.xlu0 0
        %380 = vperm.xlu0 %379, %v359
        %v381 = vpop.permute.xlu0 %380
        %382 = vset.pattern.permute.xlu0 0
        %383 = vperm.xlu0 %382, %v360
        %v384 = vpop.permute.xlu0 %383
        %385 = vset.pattern.permute.xlu0 0
        %386 = vperm.xlu0 %385, %v361
        %v387 = vpop.permute.xlu0 %386
        %388 = vset.pattern.permute.xlu0 0
        %389 = vperm.xlu0 %388, %v362
        %v390 = vpop.permute.xlu0 %389
        %391 = vset.pattern.permute.xlu0 0
        %392 = vperm.xlu0 %391, %v363
        %v393 = vpop.permute.xlu0 %392
        %394 = vset.pattern.permute.xlu0 0
        %395 = vperm.xlu0 %394, %v364
        %v396 = vpop.permute.xlu0 %395
        %397 = vset.pattern.permute.xlu0 0
        %398 = vperm.xlu0 %397, %v365
        %v399 = vpop.permute.xlu0 %398
        %400 = vset.pattern.permute.xlu0 0
        %401 = vperm.xlu0 %400, %v366
        %v402 = vpop.permute.xlu0 %401
        %403 = vset.pattern.permute.xlu0 0
        %404 = vperm.xlu0 %403, %v367
        %v405 = vpop.permute.xlu0 %404
        %406 = vset.pattern.permute.xlu0 0
        %407 = vperm.xlu0 %406, %v368
        %v408 = vpop.permute.xlu0 %407
        %409 = vset.pattern.permute.xlu0 0
        %410 = vperm.xlu0 %409, %v369
        %v411 = vpop.permute.xlu0 %410
        %412 = vset.pattern.permute.xlu0 0
        %413 = vperm.xlu0 %412, %v370
        %v414 = vpop.permute.xlu0 %413
        %415 = vset.pattern.permute.xlu0 0
        %416 = vperm.xlu0 %415, %v371
        %v417 = vpop.permute.xlu0 %416
        %418 = vset.pattern.permute.xlu0 0
        %419 = vperm.xlu0 %418, %v372
        %v420 = vpop.permute.xlu0 %419
        %vm421 = vcmp.eq.s32.totalorder %v353, %v375
        %vm422 = vcmp.eq.s32.totalorder %v354, %v375
        %vm423 = vcmp.eq.s32.totalorder %v355, %v375
        %vm424 = vcmp.eq.s32.totalorder %v356, %v375
        %vm425 = vcmp.eq.s32.totalorder %v353, %v378
        %vm426 = vcmp.eq.s32.totalorder %v354, %v378
        %vm427 = vcmp.eq.s32.totalorder %v355, %v378
        %vm428 = vcmp.eq.s32.totalorder %v356, %v378
        %vm429 = vcmp.eq.s32.totalorder %v353, %v381
        %vm430 = vcmp.eq.s32.totalorder %v354, %v381
        %vm431 = vcmp.eq.s32.totalorder %v355, %v381
        %vm432 = vcmp.eq.s32.totalorder %v356, %v381
        %vm433 = vcmp.eq.s32.totalorder %v353, %v384
        %vm434 = vcmp.eq.s32.totalorder %v354, %v384
        %vm435 = vcmp.eq.s32.totalorder %v355, %v384
        %vm436 = vcmp.eq.s32.totalorder %v356, %v384
        %vm437 = vcmp.eq.s32.totalorder %v353, %v387
        %vm438 = vcmp.eq.s32.totalorder %v354, %v387
        %vm439 = vcmp.eq.s32.totalorder %v355, %v387
        %vm440 = vcmp.eq.s32.totalorder %v356, %v387
        %vm441 = vcmp.eq.s32.totalorder %v353, %v390
        %vm442 = vcmp.eq.s32.totalorder %v354, %v390
        %vm443 = vcmp.eq.s32.totalorder %v355, %v390
        %vm444 = vcmp.eq.s32.totalorder %v356, %v390
        %vm445 = vcmp.eq.s32.totalorder %v353, %v393
        %vm446 = vcmp.eq.s32.totalorder %v354, %v393
        %vm447 = vcmp.eq.s32.totalorder %v355, %v393
        %vm448 = vcmp.eq.s32.totalorder %v356, %v393
        %vm449 = vcmp.eq.s32.totalorder %v353, %v396
        %vm450 = vcmp.eq.s32.totalorder %v354, %v396
        %vm451 = vcmp.eq.s32.totalorder %v355, %v396
        %vm452 = vcmp.eq.s32.totalorder %v356, %v396
        %vm453 = vcmp.eq.s32.totalorder %v353, %v399
        %vm454 = vcmp.eq.s32.totalorder %v354, %v399
        %vm455 = vcmp.eq.s32.totalorder %v355, %v399
        %vm456 = vcmp.eq.s32.totalorder %v356, %v399
        %vm457 = vcmp.eq.s32.totalorder %v353, %v402
        %vm458 = vcmp.eq.s32.totalorder %v354, %v402
        %vm459 = vcmp.eq.s32.totalorder %v355, %v402
        %vm460 = vcmp.eq.s32.totalorder %v356, %v402
        %vm461 = vcmp.eq.s32.totalorder %v353, %v405
        %vm462 = vcmp.eq.s32.totalorder %v354, %v405
        %vm463 = vcmp.eq.s32.totalorder %v355, %v405
        %vm464 = vcmp.eq.s32.totalorder %v356, %v405
        %vm465 = vcmp.eq.s32.totalorder %v353, %v408
        %vm466 = vcmp.eq.s32.totalorder %v354, %v408
        %vm467 = vcmp.eq.s32.totalorder %v355, %v408
        %vm468 = vcmp.eq.s32.totalorder %v356, %v408
        %vm469 = vcmp.eq.s32.totalorder %v353, %v411
        %vm470 = vcmp.eq.s32.totalorder %v354, %v411
        %vm471 = vcmp.eq.s32.totalorder %v355, %v411
        %vm472 = vcmp.eq.s32.totalorder %v356, %v411
        %vm473 = vcmp.eq.s32.totalorder %v353, %v414
        %vm474 = vcmp.eq.s32.totalorder %v354, %v414
        %vm475 = vcmp.eq.s32.totalorder %v355, %v414
        %vm476 = vcmp.eq.s32.totalorder %v356, %v414
        %vm477 = vcmp.eq.s32.totalorder %v353, %v417
        %vm478 = vcmp.eq.s32.totalorder %v354, %v417
        %vm479 = vcmp.eq.s32.totalorder %v355, %v417
        %vm480 = vcmp.eq.s32.totalorder %v356, %v417
        %vm481 = vcmp.eq.s32.totalorder %v353, %v420
        %vm482 = vcmp.eq.s32.totalorder %v354, %v420
        %vm483 = vcmp.eq.s32.totalorder %v355, %v420
        %vm484 = vcmp.eq.s32.totalorder %v356, %v420
        %v485 = vsel %vm421, 1, 0
        %v486 = vsel %vm422, 1, 0
        %v487 = vsel %vm423, 1, 0
        %v488 = vsel %vm424, 1, 0
        %v489 = vsel %vm425, 1, 0
        %v490 = vsel %vm426, 1, 0
        %v491 = vsel %vm427, 1, 0
        %v492 = vsel %vm428, 1, 0
        %v493 = vsel %vm429, 1, 0
        %v494 = vsel %vm430, 1, 0
        %v495 = vsel %vm431, 1, 0
        %v496 = vsel %vm432, 1, 0
        %v497 = vsel %vm433, 1, 0
        %v498 = vsel %vm434, 1, 0
        %v499 = vsel %vm435, 1, 0
        %v500 = vsel %vm436, 1, 0
        %v501 = vsel %vm437, 1, 0
        %v502 = vsel %vm438, 1, 0
        %v503 = vsel %vm439, 1, 0
        %v504 = vsel %vm440, 1, 0
        %v505 = vsel %vm441, 1, 0
        %v506 = vsel %vm442, 1, 0
        %v507 = vsel %vm443, 1, 0
        %v508 = vsel %vm444, 1, 0
        %v509 = vsel %vm445, 1, 0
        %v510 = vsel %vm446, 1, 0
        %v511 = vsel %vm447, 1, 0
        %v512 = vsel %vm448, 1, 0
        %v513 = vsel %vm449, 1, 0
        %v514 = vsel %vm450, 1, 0
        %v515 = vsel %vm451, 1, 0
        %v516 = vsel %vm452, 1, 0
        %v517 = vsel %vm453, 1, 0
        %v518 = vsel %vm454, 1, 0
        %v519 = vsel %vm455, 1, 0
        %v520 = vsel %vm456, 1, 0
        %v521 = vsel %vm457, 1, 0
        %v522 = vsel %vm458, 1, 0
        %v523 = vsel %vm459, 1, 0
        %v524 = vsel %vm460, 1, 0
        %v525 = vsel %vm461, 1, 0
        %v526 = vsel %vm462, 1, 0
        %v527 = vsel %vm463, 1, 0
        %v528 = vsel %vm464, 1, 0
        %v529 = vsel %vm465, 1, 0
        %v530 = vsel %vm466, 1, 0
        %v531 = vsel %vm467, 1, 0
        %v532 = vsel %vm468, 1, 0
        %v533 = vsel %vm469, 1, 0
        %v534 = vsel %vm470, 1, 0
        %v535 = vsel %vm471, 1, 0
        %v536 = vsel %vm472, 1, 0
        %v537 = vsel %vm473, 1, 0
        %v538 = vsel %vm474, 1, 0
        %v539 = vsel %vm475, 1, 0
        %v540 = vsel %vm476, 1, 0
        %v541 = vsel %vm477, 1, 0
        %v542 = vsel %vm478, 1, 0
        %v543 = vsel %vm479, 1, 0
        %v544 = vsel %vm480, 1, 0
        %v545 = vsel %vm481, 1, 0
        %v546 = vsel %vm482, 1, 0
        %v547 = vsel %vm483, 1, 0
        %v548 = vsel %vm484, 1, 0
        %v549 = vcvt.s32.f32 %v485
        %v550 = vcvt.s32.f32 %v486
        %v551 = vcvt.s32.f32 %v487
        %v552 = vcvt.s32.f32 %v488
        %v553 = vcvt.s32.f32 %v489
        %v554 = vcvt.s32.f32 %v490
        %v555 = vcvt.s32.f32 %v491
        %v556 = vcvt.s32.f32 %v492
        %v557 = vcvt.s32.f32 %v493
        %v558 = vcvt.s32.f32 %v494
        %v559 = vcvt.s32.f32 %v495
        %v560 = vcvt.s32.f32 %v496
        %v561 = vcvt.s32.f32 %v497
        %v562 = vcvt.s32.f32 %v498
        %v563 = vcvt.s32.f32 %v499
        %v564 = vcvt.s32.f32 %v500
        %v565 = vcvt.s32.f32 %v501
        %v566 = vcvt.s32.f32 %v502
        %v567 = vcvt.s32.f32 %v503
        %v568 = vcvt.s32.f32 %v504
        %v569 = vcvt.s32.f32 %v505
        %v570 = vcvt.s32.f32 %v506
        %v571 = vcvt.s32.f32 %v507
        %v572 = vcvt.s32.f32 %v508
        %v573 = vcvt.s32.f32 %v509
        %v574 = vcvt.s32.f32 %v510
        %v575 = vcvt.s32.f32 %v511
        %v576 = vcvt.s32.f32 %v512
        %v577 = vcvt.s32.f32 %v513
        %v578 = vcvt.s32.f32 %v514
        %v579 = vcvt.s32.f32 %v515
        %v580 = vcvt.s32.f32 %v516
        %v581 = vcvt.s32.f32 %v517
        %v582 = vcvt.s32.f32 %v518
        %v583 = vcvt.s32.f32 %v519
        %v584 = vcvt.s32.f32 %v520
        %v585 = vcvt.s32.f32 %v521
        %v586 = vcvt.s32.f32 %v522
        %v587 = vcvt.s32.f32 %v523
        %v588 = vcvt.s32.f32 %v524
        %v589 = vcvt.s32.f32 %v525
        %v590 = vcvt.s32.f32 %v526
        %v591 = vcvt.s32.f32 %v527
        %v592 = vcvt.s32.f32 %v528
        %v593 = vcvt.s32.f32 %v529
        %v594 = vcvt.s32.f32 %v530
        %v595 = vcvt.s32.f32 %v531
        %v596 = vcvt.s32.f32 %v532
        %v597 = vcvt.s32.f32 %v533
        %v598 = vcvt.s32.f32 %v534
        %v599 = vcvt.s32.f32 %v535
        %v600 = vcvt.s32.f32 %v536
        %v601 = vcvt.s32.f32 %v537
        %v602 = vcvt.s32.f32 %v538
        %v603 = vcvt.s32.f32 %v539
        %v604 = vcvt.s32.f32 %v540
        %v605 = vcvt.s32.f32 %v541
        %v606 = vcvt.s32.f32 %v542
        %v607 = vcvt.s32.f32 %v543
        %v608 = vcvt.s32.f32 %v544
        %v609 = vcvt.s32.f32 %v545
        %v610 = vcvt.s32.f32 %v546
        %v611 = vcvt.s32.f32 %v547
        %v612 = vcvt.s32.f32 %v548
        %v613 = vld [vmem:[#allocation2] sm:$0xff]
        %v614 = vld [vmem:[#allocation2 + $0x8] sm:$0xff]
        %v615 = vld [vmem:[#allocation2 + $0x10] sm:$0xff]
        %v616 = vld [vmem:[#allocation2 + $0x18] sm:$0xff]
        %v617 = vld [vmem:[#allocation2 + $0x20] sm:$0xff]
        %v618 = vld [vmem:[#allocation2 + $0x28] sm:$0xff]
        %v619 = vld [vmem:[#allocation2 + $0x30] sm:$0xff]
        %v620 = vld [vmem:[#allocation2 + $0x38] sm:$0xff]
        %v621 = vld [vmem:[#allocation2 + $0x40] sm:$0xff]
        %v622 = vld [vmem:[#allocation2 + $0x48] sm:$0xff]
        %v623 = vld [vmem:[#allocation2 + $0x50] sm:$0xff]
        %v624 = vld [vmem:[#allocation2 + $0x58] sm:$0xff]
        %v625 = vld [vmem:[#allocation2 + $0x60] sm:$0xff]
        %v626 = vld [vmem:[#allocation2 + $0x68] sm:$0xff]
        %v627 = vld [vmem:[#allocation2 + $0x70] sm:$0xff]
        %v628 = vld [vmem:[#allocation2 + $0x78] sm:$0xff]
        %v629 = vld [vmem:[#allocation2 + $0x80] sm:$0xff]
        %v630 = vld [vmem:[#allocation2 + $0x88] sm:$0xff]
        %v631 = vld [vmem:[#allocation2 + $0x90] sm:$0xff]
        %v632 = vld [vmem:[#allocation2 + $0x98] sm:$0xff]
        %v633 = vld [vmem:[#allocation2 + $0xa0] sm:$0xff]
        %v634 = vld [vmem:[#allocation2 + $0xa8] sm:$0xff]
        %v635 = vld [vmem:[#allocation2 + $0xb0] sm:$0xff]
        %v636 = vld [vmem:[#allocation2 + $0xb8] sm:$0xff]
        %v637 = vld [vmem:[#allocation2 + $0xc0] sm:$0xff]
        %v638 = vld [vmem:[#allocation2 + $0xc8] sm:$0xff]
        %v639 = vld [vmem:[#allocation2 + $0xd0] sm:$0xff]
        %v640 = vld [vmem:[#allocation2 + $0xd8] sm:$0xff]
        %v641 = vld [vmem:[#allocation2 + $0xe0] sm:$0xff]
        %v642 = vld [vmem:[#allocation2 + $0xe8] sm:$0xff]
        %v643 = vld [vmem:[#allocation2 + $0xf0] sm:$0xff]
        %v644 = vld [vmem:[#allocation2 + $0xf8] sm:$0xff]
        %v645 = vld [vmem:[#allocation2 + $0x100] sm:$0xff]
        %v646 = vld [vmem:[#allocation2 + $0x108] sm:$0xff]
        %v647 = vld [vmem:[#allocation2 + $0x110] sm:$0xff]
        %v648 = vld [vmem:[#allocation2 + $0x118] sm:$0xff]
        %v649 = vld [vmem:[#allocation2 + $0x120] sm:$0xff]
        %v650 = vld [vmem:[#allocation2 + $0x128] sm:$0xff]
        %v651 = vld [vmem:[#allocation2 + $0x130] sm:$0xff]
        %v652 = vld [vmem:[#allocation2 + $0x138] sm:$0xff]
        %v653 = vld [vmem:[#allocation2 + $0x140] sm:$0xff]
        %v654 = vld [vmem:[#allocation2 + $0x148] sm:$0xff]
        %v655 = vld [vmem:[#allocation2 + $0x150] sm:$0xff]
        %v656 = vld [vmem:[#allocation2 + $0x158] sm:$0xff]
        %v657 = vld [vmem:[#allocation2 + $0x160] sm:$0xff]
        %v658 = vld [vmem:[#allocation2 + $0x168] sm:$0xff]
        %v659 = vld [vmem:[#allocation2 + $0x170] sm:$0xff]
        %v660 = vld [vmem:[#allocation2 + $0x178] sm:$0xff]
        %v661 = vld [vmem:[#allocation2 + $0x180] sm:$0xff]
        %v662 = vld [vmem:[#allocation2 + $0x188] sm:$0xff]
        %v663 = vld [vmem:[#allocation2 + $0x190] sm:$0xff]
        %v664 = vld [vmem:[#allocation2 + $0x198] sm:$0xff]
        %v665 = vld [vmem:[#allocation2 + $0x1a0] sm:$0xff]
        %v666 = vld [vmem:[#allocation2 + $0x1a8] sm:$0xff]
        %v667 = vld [vmem:[#allocation2 + $0x1b0] sm:$0xff]
        %v668 = vld [vmem:[#allocation2 + $0x1b8] sm:$0xff]
        %v669 = vld [vmem:[#allocation2 + $0x1c0] sm:$0xff]
        %v670 = vld [vmem:[#allocation2 + $0x1c8] sm:$0xff]
        %v671 = vld [vmem:[#allocation2 + $0x1d0] sm:$0xff]
        %v672 = vld [vmem:[#allocation2 + $0x1d8] sm:$0xff]
        %v673 = vld [vmem:[#allocation2 + $0x1e0] sm:$0xff]
        %v674 = vld [vmem:[#allocation2 + $0x1e8] sm:$0xff]
        %v675 = vld [vmem:[#allocation2 + $0x1f0] sm:$0xff]
        %v676 = vld [vmem:[#allocation2 + $0x1f8] sm:$0xff]
        %v677 = vld [vmem:[#allocation2 + $0x200] sm:$0xff]
        %v678 = vld [vmem:[#allocation2 + $0x208] sm:$0xff]
        %v679 = vld [vmem:[#allocation2 + $0x210] sm:$0xff]
        %v680 = vld [vmem:[#allocation2 + $0x218] sm:$0xff]
        %v681 = vld [vmem:[#allocation2 + $0x220] sm:$0xff]
        %v682 = vld [vmem:[#allocation2 + $0x228] sm:$0xff]
        %v683 = vld [vmem:[#allocation2 + $0x230] sm:$0xff]
        %v684 = vld [vmem:[#allocation2 + $0x238] sm:$0xff]
        %v685 = vld [vmem:[#allocation2 + $0x240] sm:$0xff]
        %v686 = vld [vmem:[#allocation2 + $0x248] sm:$0xff]
        %v687 = vld [vmem:[#allocation2 + $0x250] sm:$0xff]
        %v688 = vld [vmem:[#allocation2 + $0x258] sm:$0xff]
        %v689 = vld [vmem:[#allocation2 + $0x260] sm:$0xff]
        %v690 = vld [vmem:[#allocation2 + $0x268] sm:$0xff]
        %v691 = vld [vmem:[#allocation2 + $0x270] sm:$0xff]
        %v692 = vld [vmem:[#allocation2 + $0x278] sm:$0xff]
        %v693 = vld [vmem:[#allocation2 + $0x280] sm:$0xff]
        %v694 = vld [vmem:[#allocation2 + $0x288] sm:$0xff]
        %v695 = vld [vmem:[#allocation2 + $0x290] sm:$0xff]
        %v696 = vld [vmem:[#allocation2 + $0x298] sm:$0xff]
        %v697 = vld [vmem:[#allocation2 + $0x2a0] sm:$0xff]
        %v698 = vld [vmem:[#allocation2 + $0x2a8] sm:$0xff]
        %v699 = vld [vmem:[#allocation2 + $0x2b0] sm:$0xff]
        %v700 = vld [vmem:[#allocation2 + $0x2b8] sm:$0xff]
        %v701 = vld [vmem:[#allocation2 + $0x2c0] sm:$0xff]
        %v702 = vld [vmem:[#allocation2 + $0x2c8] sm:$0xff]
        %v703 = vld [vmem:[#allocation2 + $0x2d0] sm:$0xff]
        %v704 = vld [vmem:[#allocation2 + $0x2d8] sm:$0xff]
        %v705 = vld [vmem:[#allocation2 + $0x2e0] sm:$0xff]
        %v706 = vld [vmem:[#allocation2 + $0x2e8] sm:$0xff]
        %v707 = vld [vmem:[#allocation2 + $0x2f0] sm:$0xff]
        %v708 = vld [vmem:[#allocation2 + $0x2f8] sm:$0xff]
        %v709 = vld [vmem:[#allocation2 + $0x300] sm:$0xff]
        %v710 = vld [vmem:[#allocation2 + $0x308] sm:$0xff]
        %v711 = vld [vmem:[#allocation2 + $0x310] sm:$0xff]
        %v712 = vld [vmem:[#allocation2 + $0x318] sm:$0xff]
        %v713 = vld [vmem:[#allocation2 + $0x320] sm:$0xff]
        %v714 = vld [vmem:[#allocation2 + $0x328] sm:$0xff]
        %v715 = vld [vmem:[#allocation2 + $0x330] sm:$0xff]
        %v716 = vld [vmem:[#allocation2 + $0x338] sm:$0xff]
        %v717 = vld [vmem:[#allocation2 + $0x340] sm:$0xff]
        %v718 = vld [vmem:[#allocation2 + $0x348] sm:$0xff]
        %v719 = vld [vmem:[#allocation2 + $0x350] sm:$0xff]
        %v720 = vld [vmem:[#allocation2 + $0x358] sm:$0xff]
        %v721 = vld [vmem:[#allocation2 + $0x360] sm:$0xff]
        %v722 = vld [vmem:[#allocation2 + $0x368] sm:$0xff]
        %v723 = vld [vmem:[#allocation2 + $0x370] sm:$0xff]
        %v724 = vld [vmem:[#allocation2 + $0x378] sm:$0xff]
        %v725 = vld [vmem:[#allocation2 + $0x380] sm:$0xff]
        %v726 = vld [vmem:[#allocation2 + $0x388] sm:$0xff]
        %v727 = vld [vmem:[#allocation2 + $0x390] sm:$0xff]
        %v728 = vld [vmem:[#allocation2 + $0x398] sm:$0xff]
        %v729 = vld [vmem:[#allocation2 + $0x3a0] sm:$0xff]
        %v730 = vld [vmem:[#allocation2 + $0x3a8] sm:$0xff]
        %v731 = vld [vmem:[#allocation2 + $0x3b0] sm:$0xff]
        %v732 = vld [vmem:[#allocation2 + $0x3b8] sm:$0xff]
        %v733 = vld [vmem:[#allocation2 + $0x3c0] sm:$0xff]
        %v734 = vld [vmem:[#allocation2 + $0x3c8] sm:$0xff]
        %v735 = vld [vmem:[#allocation2 + $0x3d0] sm:$0xff]
        %v736 = vld [vmem:[#allocation2 + $0x3d8] sm:$0xff]
        %v737 = vld [vmem:[#allocation2 + $0x3e0] sm:$0xff]
        %v738 = vld [vmem:[#allocation2 + $0x3e8] sm:$0xff]
        %v739 = vld [vmem:[#allocation2 + $0x3f0] sm:$0xff]
        %v740 = vld [vmem:[#allocation2 + $0x3f8] sm:$0xff]
        %v741 = vld [vmem:[%s349] sm:$0xff]
        %v742 = vld [vmem:[%s349 + $0x8] sm:$0xff]
        %v743 = vld [vmem:[%s349 + $0x10] sm:$0xff]
        %v744 = vld [vmem:[%s349 + $0x18] sm:$0xff]
        %v745 = vld [vmem:[%s349 + $0x20] sm:$0xff]
        %v746 = vld [vmem:[%s349 + $0x28] sm:$0xff]
        %v747 = vld [vmem:[%s349 + $0x30] sm:$0xff]
        %v748 = vld [vmem:[%s349 + $0x38] sm:$0xff]
        %v749 = vld [vmem:[%s349 + $0x40] sm:$0xff]
        %v750 = vld [vmem:[%s349 + $0x48] sm:$0xff]
        %v751 = vld [vmem:[%s349 + $0x50] sm:$0xff]
        %v752 = vld [vmem:[%s349 + $0x58] sm:$0xff]
        %v753 = vld [vmem:[%s349 + $0x60] sm:$0xff]
        %v754 = vld [vmem:[%s349 + $0x68] sm:$0xff]
        %v755 = vld [vmem:[%s349 + $0x70] sm:$0xff]
        %v756 = vld [vmem:[%s349 + $0x78] sm:$0xff]
        %v757 = vld [vmem:[#allocation5] sm:$0xff]
        %v758 = vld [vmem:[#allocation5 + $0x8] sm:$0xff]
        %v759 = vld [vmem:[#allocation5 + $0x10] sm:$0xff]
        %v760 = vld [vmem:[#allocation5 + $0x18] sm:$0xff]
        %v761 = vld [vmem:[#allocation5 + $0x20] sm:$0xff]
        %v762 = vld [vmem:[#allocation5 + $0x28] sm:$0xff]
        %v763 = vld [vmem:[#allocation5 + $0x30] sm:$0xff]
        %v764 = vld [vmem:[#allocation5 + $0x38] sm:$0xff]
        %v765 = vld [vmem:[#allocation5 + $0x40] sm:$0xff]
        %v766 = vld [vmem:[#allocation5 + $0x48] sm:$0xff]
        %v767 = vld [vmem:[#allocation5 + $0x50] sm:$0xff]
        %v768 = vld [vmem:[#allocation5 + $0x58] sm:$0xff]
        %v769 = vld [vmem:[#allocation5 + $0x60] sm:$0xff]
        %v770 = vld [vmem:[#allocation5 + $0x68] sm:$0xff]
        %v771 = vld [vmem:[#allocation5 + $0x70] sm:$0xff]
        %v772 = vld [vmem:[#allocation5 + $0x78] sm:$0xff]
        %v773 = vld [vmem:[#allocation5 + $0x80] sm:$0xff]
        %v774 = vld [vmem:[#allocation5 + $0x88] sm:$0xff]
        %v775 = vld [vmem:[#allocation5 + $0x90] sm:$0xff]
        %v776 = vld [vmem:[#allocation5 + $0x98] sm:$0xff]
        %v777 = vld [vmem:[#allocation5 + $0xa0] sm:$0xff]
        %v778 = vld [vmem:[#allocation5 + $0xa8] sm:$0xff]
        %v779 = vld [vmem:[#allocation5 + $0xb0] sm:$0xff]
        %v780 = vld [vmem:[#allocation5 + $0xb8] sm:$0xff]
        %v781 = vld [vmem:[#allocation5 + $0xc0] sm:$0xff]
        %v782 = vld [vmem:[#allocation5 + $0xc8] sm:$0xff]
        %v783 = vld [vmem:[#allocation5 + $0xd0] sm:$0xff]
        %v784 = vld [vmem:[#allocation5 + $0xd8] sm:$0xff]
        %v785 = vld [vmem:[#allocation5 + $0xe0] sm:$0xff]
        %v786 = vld [vmem:[#allocation5 + $0xe8] sm:$0xff]
        %v787 = vld [vmem:[#allocation5 + $0xf0] sm:$0xff]
        %v788 = vld [vmem:[#allocation5 + $0xf8] sm:$0xff]
        %789 = vmatpush.msra.mxu0 %v787
        %790 = vmatpush.msra.mxu0 %v785
        %791 = vmatpush.msra.mxu0 %v783
        %792 = vmatpush.msra.mxu0 %v781
        %793 = vmatpush.msra.mxu0 %v779
        %794 = vmatpush.msra.mxu0 %v777
        %795 = vmatpush.msra.mxu0 %v775
        %796 = vmatpush.msra.mxu0 %v773
        %797 = vmatpush.msra.mxu0 %v771
        %798 = vmatpush.msra.mxu0 %v769
        %799 = vmatpush.msra.mxu0 %v767
        %800 = vmatpush.msra.mxu0 %v765
        %801 = vmatpush.msra.mxu0 %v763
        %802 = vmatpush.msra.mxu0 %v761
        %803 = vmatpush.msra.mxu0 %v759
        %804 = vmatpush.msra.mxu0 %v757
        %805 = vmatmul.f32.gmra.mxu0 %v741
        %v806 = vpop.f32.mrf.mxu0
        %v807 = vadd.f32 0.0, %v806
        %808 = vmatmul.f32.gmra.mxu0 %v742
        %v809 = vpop.f32.mrf.mxu0
        %v810 = vadd.f32 0.0, %v809
        %811 = vmatmul.f32.gmra.mxu0 %v743
        %v812 = vpop.f32.mrf.mxu0
        %v813 = vadd.f32 0.0, %v812
        %814 = vmatmul.f32.gmra.mxu0 %v744
        %v815 = vpop.f32.mrf.mxu0
        %v816 = vadd.f32 0.0, %v815
        %817 = vmatmul.f32.gmra.mxu0 %v745
        %v818 = vpop.f32.mrf.mxu0
        %v819 = vadd.f32 0.0, %v818
        %820 = vmatmul.f32.gmra.mxu0 %v746
        %v821 = vpop.f32.mrf.mxu0
        %v822 = vadd.f32 0.0, %v821
        %823 = vmatmul.f32.gmra.mxu0 %v747
        %v824 = vpop.f32.mrf.mxu0
        %v825 = vadd.f32 0.0, %v824
        %826 = vmatmul.f32.gmra.mxu0 %v748
        %v827 = vpop.f32.mrf.mxu0
        %v828 = vadd.f32 0.0, %v827
        %829 = vmatmul.f32.gmra.mxu0 %v749
        %v830 = vpop.f32.mrf.mxu0
        %v831 = vadd.f32 0.0, %v830
        %832 = vmatmul.f32.gmra.mxu0 %v750
        %v833 = vpop.f32.mrf.mxu0
        %v834 = vadd.f32 0.0, %v833
        %835 = vmatmul.f32.gmra.mxu0 %v751
        %v836 = vpop.f32.mrf.mxu0
        %v837 = vadd.f32 0.0, %v836
        %838 = vmatmul.f32.gmra.mxu0 %v752
        %v839 = vpop.f32.mrf.mxu0
        %v840 = vadd.f32 0.0, %v839
        %841 = vmatmul.f32.gmra.mxu0 %v753
        %v842 = vpop.f32.mrf.mxu0
        %v843 = vadd.f32 0.0, %v842
        %844 = vmatmul.f32.gmra.mxu0 %v754
        %v845 = vpop.f32.mrf.mxu0
        %v846 = vadd.f32 0.0, %v845
        %847 = vmatmul.f32.gmra.mxu0 %v755
        %v848 = vpop.f32.mrf.mxu0
        %v849 = vadd.f32 0.0, %v848
        %850 = vmatmul.f32.gmra.mxu0 %v756
        %v851 = vpop.f32.mrf.mxu0
        %v852 = vadd.f32 0.0, %v851
        %853 = vdwg.mxu0
        %854 = vmatpush.msra.mxu0 %v788
        %855 = vmatpush.msra.mxu0 %v786
        %856 = vmatpush.msra.mxu0 %v784
        %857 = vmatpush.msra.mxu0 %v782
        %858 = vmatpush.msra.mxu0 %v780
        %859 = vmatpush.msra.mxu0 %v778
        %860 = vmatpush.msra.mxu0 %v776
        %861 = vmatpush.msra.mxu0 %v774
        %862 = vmatpush.msra.mxu0 %v772
        %863 = vmatpush.msra.mxu0 %v770
        %864 = vmatpush.msra.mxu0 %v768
        %865 = vmatpush.msra.mxu0 %v766
        %866 = vmatpush.msra.mxu0 %v764
        %867 = vmatpush.msra.mxu0 %v762
        %868 = vmatpush.msra.mxu0 %v760
        %869 = vmatpush.msra.mxu0 %v758
        %870 = vmatmul.f32.gmra.mxu0 %v741
        %v871 = vpop.f32.mrf.mxu0
        %v872 = vadd.f32 0.0, %v871
        %873 = vmatmul.f32.gmra.mxu0 %v742
        %v874 = vpop.f32.mrf.mxu0
        %v875 = vadd.f32 0.0, %v874
        %876 = vmatmul.f32.gmra.mxu0 %v743
        %v877 = vpop.f32.mrf.mxu0
        %v878 = vadd.f32 0.0, %v877
        %879 = vmatmul.f32.gmra.mxu0 %v744
        %v880 = vpop.f32.mrf.mxu0
        %v881 = vadd.f32 0.0, %v880
        %882 = vmatmul.f32.gmra.mxu0 %v745
        %v883 = vpop.f32.mrf.mxu0
        %v884 = vadd.f32 0.0, %v883
        %885 = vmatmul.f32.gmra.mxu0 %v746
        %v886 = vpop.f32.mrf.mxu0
        %v887 = vadd.f32 0.0, %v886
        %888 = vmatmul.f32.gmra.mxu0 %v747
        %v889 = vpop.f32.mrf.mxu0
        %v890 = vadd.f32 0.0, %v889
        %891 = vmatmul.f32.gmra.mxu0 %v748
        %v892 = vpop.f32.mrf.mxu0
        %v893 = vadd.f32 0.0, %v892
        %894 = vmatmul.f32.gmra.mxu0 %v749
        %v895 = vpop.f32.mrf.mxu0
        %v896 = vadd.f32 0.0, %v895
        %897 = vmatmul.f32.gmra.mxu0 %v750
        %v898 = vpop.f32.mrf.mxu0
        %v899 = vadd.f32 0.0, %v898
        %900 = vmatmul.f32.gmra.mxu0 %v751
        %v901 = vpop.f32.mrf.mxu0
        %v902 = vadd.f32 0.0, %v901
        %903 = vmatmul.f32.gmra.mxu0 %v752
        %v904 = vpop.f32.mrf.mxu0
        %v905 = vadd.f32 0.0, %v904
        %906 = vmatmul.f32.gmra.mxu0 %v753
        %v907 = vpop.f32.mrf.mxu0
        %v908 = vadd.f32 0.0, %v907
        %909 = vmatmul.f32.gmra.mxu0 %v754
        %v910 = vpop.f32.mrf.mxu0
        %v911 = vadd.f32 0.0, %v910
        %912 = vmatmul.f32.gmra.mxu0 %v755
        %v913 = vpop.f32.mrf.mxu0
        %v914 = vadd.f32 0.0, %v913
        %915 = vmatmul.f32.gmra.mxu0 %v756
        %v916 = vpop.f32.mrf.mxu0
        %v917 = vadd.f32 0.0, %v916
        %918 = vdwg.mxu0
        %919 = vmatpush.msra.mxu0 %v643
        %920 = vmatpush.msra.mxu0 %v641
        %921 = vmatpush.msra.mxu0 %v639
        %922 = vmatpush.msra.mxu0 %v637
        %923 = vmatpush.msra.mxu0 %v635
        %924 = vmatpush.msra.mxu0 %v633
        %925 = vmatpush.msra.mxu0 %v631
        %926 = vmatpush.msra.mxu0 %v629
        %927 = vmatpush.msra.mxu0 %v627
        %928 = vmatpush.msra.mxu0 %v625
        %929 = vmatpush.msra.mxu0 %v623
        %930 = vmatpush.msra.mxu0 %v621
        %931 = vmatpush.msra.mxu0 %v619
        %932 = vmatpush.msra.mxu0 %v617
        %933 = vmatpush.msra.mxu0 %v615
        %934 = vmatpush.msra.mxu0 %v613
        %935 = vmatmul.f32.gmra.mxu0 %v549
        %v936 = vpop.f32.mrf.mxu0
        %v937 = vadd.f32 %v807, %v936
        %938 = vmatmul.f32.gmra.mxu0 %v553
        %v939 = vpop.f32.mrf.mxu0
        %v940 = vadd.f32 %v810, %v939
        %941 = vmatmul.f32.gmra.mxu0 %v557
        %v942 = vpop.f32.mrf.mxu0
        %v943 = vadd.f32 %v813, %v942
        %944 = vmatmul.f32.gmra.mxu0 %v561
        %v945 = vpop.f32.mrf.mxu0
        %v946 = vadd.f32 %v816, %v945
        %947 = vmatmul.f32.gmra.mxu0 %v565
        %v948 = vpop.f32.mrf.mxu0
        %v949 = vadd.f32 %v819, %v948
        %950 = vmatmul.f32.gmra.mxu0 %v569
        %v951 = vpop.f32.mrf.mxu0
        %v952 = vadd.f32 %v822, %v951
        %953 = vmatmul.f32.gmra.mxu0 %v573
        %v954 = vpop.f32.mrf.mxu0
        %v955 = vadd.f32 %v825, %v954
        %956 = vmatmul.f32.gmra.mxu0 %v577
        %v957 = vpop.f32.mrf.mxu0
        %v958 = vadd.f32 %v828, %v957
        %959 = vmatmul.f32.gmra.mxu0 %v581
        %v960 = vpop.f32.mrf.mxu0
        %v961 = vadd.f32 %v831, %v960
        %962 = vmatmul.f32.gmra.mxu0 %v585
        %v963 = vpop.f32.mrf.mxu0
        %v964 = vadd.f32 %v834, %v963
        %965 = vmatmul.f32.gmra.mxu0 %v589
        %v966 = vpop.f32.mrf.mxu0
        %v967 = vadd.f32 %v837, %v966
        %968 = vmatmul.f32.gmra.mxu0 %v593
        %v969 = vpop.f32.mrf.mxu0
        %v970 = vadd.f32 %v840, %v969
        %971 = vmatmul.f32.gmra.mxu0 %v597
        %v972 = vpop.f32.mrf.mxu0
        %v973 = vadd.f32 %v843, %v972
        %974 = vmatmul.f32.gmra.mxu0 %v601
        %v975 = vpop.f32.mrf.mxu0
        %v976 = vadd.f32 %v846, %v975
        %977 = vmatmul.f32.gmra.mxu0 %v605
        %v978 = vpop.f32.mrf.mxu0
        %v979 = vadd.f32 %v849, %v978
        %980 = vmatmul.f32.gmra.mxu0 %v609
        %v981 = vpop.f32.mrf.mxu0
        %v982 = vadd.f32 %v852, %v981
        %983 = vdwg.mxu0
        %984 = vmatpush.msra.mxu0 %v675
        %985 = vmatpush.msra.mxu0 %v673
        %986 = vmatpush.msra.mxu0 %v671
        %987 = vmatpush.msra.mxu0 %v669
        %988 = vmatpush.msra.mxu0 %v667
        %989 = vmatpush.msra.mxu0 %v665
        %990 = vmatpush.msra.mxu0 %v663
        %991 = vmatpush.msra.mxu0 %v661
        %992 = vmatpush.msra.mxu0 %v659
        %993 = vmatpush.msra.mxu0 %v657
        %994 = vmatpush.msra.mxu0 %v655
        %995 = vmatpush.msra.mxu0 %v653
        %996 = vmatpush.msra.mxu0 %v651
        %997 = vmatpush.msra.mxu0 %v649
        %998 = vmatpush.msra.mxu0 %v647
        %999 = vmatpush.msra.mxu0 %v645
        %1000 = vmatmul.f32.gmra.mxu0 %v550
        %v1001 = vpop.f32.mrf.mxu0
        %v1002 = vadd.f32 %v937, %v1001
        %1003 = vmatmul.f32.gmra.mxu0 %v554
        %v1004 = vpop.f32.mrf.mxu0
        %v1005 = vadd.f32 %v940, %v1004
        %1006 = vmatmul.f32.gmra.mxu0 %v558
        %v1007 = vpop.f32.mrf.mxu0
        %v1008 = vadd.f32 %v943, %v1007
        %1009 = vmatmul.f32.gmra.mxu0 %v562
        %v1010 = vpop.f32.mrf.mxu0
        %v1011 = vadd.f32 %v946, %v1010
        %1012 = vmatmul.f32.gmra.mxu0 %v566
        %v1013 = vpop.f32.mrf.mxu0
        %v1014 = vadd.f32 %v949, %v1013
        %1015 = vmatmul.f32.gmra.mxu0 %v570
        %v1016 = vpop.f32.mrf.mxu0
        %v1017 = vadd.f32 %v952, %v1016
        %1018 = vmatmul.f32.gmra.mxu0 %v574
        %v1019 = vpop.f32.mrf.mxu0
        %v1020 = vadd.f32 %v955, %v1019
        %1021 = vmatmul.f32.gmra.mxu0 %v578
        %v1022 = vpop.f32.mrf.mxu0
        %v1023 = vadd.f32 %v958, %v1022
        %1024 = vmatmul.f32.gmra.mxu0 %v582
        %v1025 = vpop.f32.mrf.mxu0
        %v1026 = vadd.f32 %v961, %v1025
        %1027 = vmatmul.f32.gmra.mxu0 %v586
        %v1028 = vpop.f32.mrf.mxu0
        %v1029 = vadd.f32 %v964, %v1028
        %1030 = vmatmul.f32.gmra.mxu0 %v590
        %v1031 = vpop.f32.mrf.mxu0
        %v1032 = vadd.f32 %v967, %v1031
        %1033 = vmatmul.f32.gmra.mxu0 %v594
        %v1034 = vpop.f32.mrf.mxu0
        %v1035 = vadd.f32 %v970, %v1034
        %1036 = vmatmul.f32.gmra.mxu0 %v598
        %v1037 = vpop.f32.mrf.mxu0
        %v1038 = vadd.f32 %v973, %v1037
        %1039 = vmatmul.f32.gmra.mxu0 %v602
        %v1040 = vpop.f32.mrf.mxu0
        %v1041 = vadd.f32 %v976, %v1040
        %1042 = vmatmul.f32.gmra.mxu0 %v606
        %v1043 = vpop.f32.mrf.mxu0
        %v1044 = vadd.f32 %v979, %v1043
        %1045 = vmatmul.f32.gmra.mxu0 %v610
        %v1046 = vpop.f32.mrf.mxu0
        %v1047 = vadd.f32 %v982, %v1046
        %1048 = vdwg.mxu0
        %1049 = vmatpush.msra.mxu0 %v707
        %1050 = vmatpush.msra.mxu0 %v705
        %1051 = vmatpush.msra.mxu0 %v703
        %1052 = vmatpush.msra.mxu0 %v701
        %1053 = vmatpush.msra.mxu0 %v699
        %1054 = vmatpush.msra.mxu0 %v697
        %1055 = vmatpush.msra.mxu0 %v695
        %1056 = vmatpush.msra.mxu0 %v693
        %1057 = vmatpush.msra.mxu0 %v691
        %1058 = vmatpush.msra.mxu0 %v689
        %1059 = vmatpush.msra.mxu0 %v687
        %1060 = vmatpush.msra.mxu0 %v685
        %1061 = vmatpush.msra.mxu0 %v683
        %1062 = vmatpush.msra.mxu0 %v681
        %1063 = vmatpush.msra.mxu0 %v679
        %1064 = vmatpush.msra.mxu0 %v677
        %1065 = vmatmul.f32.gmra.mxu0 %v551
        %v1066 = vpop.f32.mrf.mxu0
        %v1067 = vadd.f32 %v1002, %v1066
        %1068 = vmatmul.f32.gmra.mxu0 %v555
        %v1069 = vpop.f32.mrf.mxu0
        %v1070 = vadd.f32 %v1005, %v1069
        %1071 = vmatmul.f32.gmra.mxu0 %v559
        %v1072 = vpop.f32.mrf.mxu0
        %v1073 = vadd.f32 %v1008, %v1072
        %1074 = vmatmul.f32.gmra.mxu0 %v563
        %v1075 = vpop.f32.mrf.mxu0
        %v1076 = vadd.f32 %v1011, %v1075
        %1077 = vmatmul.f32.gmra.mxu0 %v567
        %v1078 = vpop.f32.mrf.mxu0
        %v1079 = vadd.f32 %v1014, %v1078
        %1080 = vmatmul.f32.gmra.mxu0 %v571
        %v1081 = vpop.f32.mrf.mxu0
        %v1082 = vadd.f32 %v1017, %v1081
        %1083 = vmatmul.f32.gmra.mxu0 %v575
        %v1084 = vpop.f32.mrf.mxu0
        %v1085 = vadd.f32 %v1020, %v1084
        %1086 = vmatmul.f32.gmra.mxu0 %v579
        %v1087 = vpop.f32.mrf.mxu0
        %v1088 = vadd.f32 %v1023, %v1087
        %1089 = vmatmul.f32.gmra.mxu0 %v583
        %v1090 = vpop.f32.mrf.mxu0
        %v1091 = vadd.f32 %v1026, %v1090
        %1092 = vmatmul.f32.gmra.mxu0 %v587
        %v1093 = vpop.f32.mrf.mxu0
        %v1094 = vadd.f32 %v1029, %v1093
        %1095 = vmatmul.f32.gmra.mxu0 %v591
        %v1096 = vpop.f32.mrf.mxu0
        %v1097 = vadd.f32 %v1032, %v1096
        %1098 = vmatmul.f32.gmra.mxu0 %v595
        %v1099 = vpop.f32.mrf.mxu0
        %v1100 = vadd.f32 %v1035, %v1099
        %1101 = vmatmul.f32.gmra.mxu0 %v599
        %v1102 = vpop.f32.mrf.mxu0
        %v1103 = vadd.f32 %v1038, %v1102
        %1104 = vmatmul.f32.gmra.mxu0 %v603
        %v1105 = vpop.f32.mrf.mxu0
        %v1106 = vadd.f32 %v1041, %v1105
        %1107 = vmatmul.f32.gmra.mxu0 %v607
        %v1108 = vpop.f32.mrf.mxu0
        %v1109 = vadd.f32 %v1044, %v1108
        %1110 = vmatmul.f32.gmra.mxu0 %v611
        %v1111 = vpop.f32.mrf.mxu0
        %v1112 = vadd.f32 %v1047, %v1111
        %1113 = vdwg.mxu0
        %1114 = vmatpush.msra.mxu0 %v739
        %1115 = vmatpush.msra.mxu0 %v737
        %1116 = vmatpush.msra.mxu0 %v735
        %1117 = vmatpush.msra.mxu0 %v733
        %1118 = vmatpush.msra.mxu0 %v731
        %1119 = vmatpush.msra.mxu0 %v729
        %1120 = vmatpush.msra.mxu0 %v727
        %1121 = vmatpush.msra.mxu0 %v725
        %1122 = vmatpush.msra.mxu0 %v723
        %1123 = vmatpush.msra.mxu0 %v721
        %1124 = vmatpush.msra.mxu0 %v719
        %1125 = vmatpush.msra.mxu0 %v717
        %1126 = vmatpush.msra.mxu0 %v715
        %1127 = vmatpush.msra.mxu0 %v713
        %1128 = vmatpush.msra.mxu0 %v711
        %1129 = vmatpush.msra.mxu0 %v709
        %1130 = vmatmul.f32.gmra.mxu0 %v552
        %v1131 = vpop.f32.mrf.mxu0
        %v1132 = vadd.f32 %v1067, %v1131
        %1133 = vmatmul.f32.gmra.mxu0 %v556
        %v1134 = vpop.f32.mrf.mxu0
        %v1135 = vadd.f32 %v1070, %v1134
        %1136 = vmatmul.f32.gmra.mxu0 %v560
        %v1137 = vpop.f32.mrf.mxu0
        %v1138 = vadd.f32 %v1073, %v1137
        %1139 = vmatmul.f32.gmra.mxu0 %v564
        %v1140 = vpop.f32.mrf.mxu0
        %v1141 = vadd.f32 %v1076, %v1140
        %1142 = vmatmul.f32.gmra.mxu0 %v568
        %v1143 = vpop.f32.mrf.mxu0
        %v1144 = vadd.f32 %v1079, %v1143
        %1145 = vmatmul.f32.gmra.mxu0 %v572
        %v1146 = vpop.f32.mrf.mxu0
        %v1147 = vadd.f32 %v1082, %v1146
        %1148 = vmatmul.f32.gmra.mxu0 %v576
        %v1149 = vpop.f32.mrf.mxu0
        %v1150 = vadd.f32 %v1085, %v1149
        %1151 = vmatmul.f32.gmra.mxu0 %v580
        %v1152 = vpop.f32.mrf.mxu0
        %v1153 = vadd.f32 %v1088, %v1152
        %1154 = vmatmul.f32.gmra.mxu0 %v584
        %v1155 = vpop.f32.mrf.mxu0
        %v1156 = vadd.f32 %v1091, %v1155
        %1157 = vmatmul.f32.gmra.mxu0 %v588
        %v1158 = vpop.f32.mrf.mxu0
        %v1159 = vadd.f32 %v1094, %v1158
        %1160 = vmatmul.f32.gmra.mxu0 %v592
        %v1161 = vpop.f32.mrf.mxu0
        %v1162 = vadd.f32 %v1097, %v1161
        %1163 = vmatmul.f32.gmra.mxu0 %v596
        %v1164 = vpop.f32.mrf.mxu0
        %v1165 = vadd.f32 %v1100, %v1164
        %1166 = vmatmul.f32.gmra.mxu0 %v600
        %v1167 = vpop.f32.mrf.mxu0
        %v1168 = vadd.f32 %v1103, %v1167
        %1169 = vmatmul.f32.gmra.mxu0 %v604
        %v1170 = vpop.f32.mrf.mxu0
        %v1171 = vadd.f32 %v1106, %v1170
        %1172 = vmatmul.f32.gmra.mxu0 %v608
        %v1173 = vpop.f32.mrf.mxu0
        %v1174 = vadd.f32 %v1109, %v1173
        %1175 = vmatmul.f32.gmra.mxu0 %v612
        %v1176 = vpop.f32.mrf.mxu0
        %v1177 = vadd.f32 %v1112, %v1176
        %1178 = vdwg.mxu0
        %1179 = vmatpush.msra.mxu0 %v644
        %1180 = vmatpush.msra.mxu0 %v642
        %1181 = vmatpush.msra.mxu0 %v640
        %1182 = vmatpush.msra.mxu0 %v638
        %1183 = vmatpush.msra.mxu0 %v636
        %1184 = vmatpush.msra.mxu0 %v634
        %1185 = vmatpush.msra.mxu0 %v632
        %1186 = vmatpush.msra.mxu0 %v630
        %1187 = vmatpush.msra.mxu0 %v628
        %1188 = vmatpush.msra.mxu0 %v626
        %1189 = vmatpush.msra.mxu0 %v624
        %1190 = vmatpush.msra.mxu0 %v622
        %1191 = vmatpush.msra.mxu0 %v620
        %1192 = vmatpush.msra.mxu0 %v618
        %1193 = vmatpush.msra.mxu0 %v616
        %1194 = vmatpush.msra.mxu0 %v614
        %1195 = vmatmul.f32.gmra.mxu0 %v549
        %v1196 = vpop.f32.mrf.mxu0
        %v1197 = vadd.f32 %v872, %v1196
        %1198 = vmatmul.f32.gmra.mxu0 %v553
        %v1199 = vpop.f32.mrf.mxu0
        %v1200 = vadd.f32 %v875, %v1199
        %1201 = vmatmul.f32.gmra.mxu0 %v557
        %v1202 = vpop.f32.mrf.mxu0
        %v1203 = vadd.f32 %v878, %v1202
        %1204 = vmatmul.f32.gmra.mxu0 %v561
        %v1205 = vpop.f32.mrf.mxu0
        %v1206 = vadd.f32 %v881, %v1205
        %1207 = vmatmul.f32.gmra.mxu0 %v565
        %v1208 = vpop.f32.mrf.mxu0
        %v1209 = vadd.f32 %v884, %v1208
        %1210 = vmatmul.f32.gmra.mxu0 %v569
        %v1211 = vpop.f32.mrf.mxu0
        %v1212 = vadd.f32 %v887, %v1211
        %1213 = vmatmul.f32.gmra.mxu0 %v573
        %v1214 = vpop.f32.mrf.mxu0
        %v1215 = vadd.f32 %v890, %v1214
        %1216 = vmatmul.f32.gmra.mxu0 %v577
        %v1217 = vpop.f32.mrf.mxu0
        %v1218 = vadd.f32 %v893, %v1217
        %1219 = vmatmul.f32.gmra.mxu0 %v581
        %v1220 = vpop.f32.mrf.mxu0
        %v1221 = vadd.f32 %v896, %v1220
        %1222 = vmatmul.f32.gmra.mxu0 %v585
        %v1223 = vpop.f32.mrf.mxu0
        %v1224 = vadd.f32 %v899, %v1223
        %1225 = vmatmul.f32.gmra.mxu0 %v589
        %v1226 = vpop.f32.mrf.mxu0
        %v1227 = vadd.f32 %v902, %v1226
        %1228 = vmatmul.f32.gmra.mxu0 %v593
        %v1229 = vpop.f32.mrf.mxu0
        %v1230 = vadd.f32 %v905, %v1229
        %1231 = vmatmul.f32.gmra.mxu0 %v597
        %v1232 = vpop.f32.mrf.mxu0
        %v1233 = vadd.f32 %v908, %v1232
        %1234 = vmatmul.f32.gmra.mxu0 %v601
        %v1235 = vpop.f32.mrf.mxu0
        %v1236 = vadd.f32 %v911, %v1235
        %1237 = vmatmul.f32.gmra.mxu0 %v605
        %v1238 = vpop.f32.mrf.mxu0
        %v1239 = vadd.f32 %v914, %v1238
        %1240 = vmatmul.f32.gmra.mxu0 %v609
        %v1241 = vpop.f32.mrf.mxu0
        %v1242 = vadd.f32 %v917, %v1241
        %1243 = vdwg.mxu0
        %1244 = vmatpush.msra.mxu0 %v676
        %1245 = vmatpush.msra.mxu0 %v674
        %1246 = vmatpush.msra.mxu0 %v672
        %1247 = vmatpush.msra.mxu0 %v670
        %1248 = vmatpush.msra.mxu0 %v668
        %1249 = vmatpush.msra.mxu0 %v666
        %1250 = vmatpush.msra.mxu0 %v664
        %1251 = vmatpush.msra.mxu0 %v662
        %1252 = vmatpush.msra.mxu0 %v660
        %1253 = vmatpush.msra.mxu0 %v658
        %1254 = vmatpush.msra.mxu0 %v656
        %1255 = vmatpush.msra.mxu0 %v654
        %1256 = vmatpush.msra.mxu0 %v652
        %1257 = vmatpush.msra.mxu0 %v650
        %1258 = vmatpush.msra.mxu0 %v648
        %1259 = vmatpush.msra.mxu0 %v646
        %1260 = vmatmul.f32.gmra.mxu0 %v550
        %v1261 = vpop.f32.mrf.mxu0
        %v1262 = vadd.f32 %v1197, %v1261
        %1263 = vmatmul.f32.gmra.mxu0 %v554
        %v1264 = vpop.f32.mrf.mxu0
        %v1265 = vadd.f32 %v1200, %v1264
        %1266 = vmatmul.f32.gmra.mxu0 %v558
        %v1267 = vpop.f32.mrf.mxu0
        %v1268 = vadd.f32 %v1203, %v1267
        %1269 = vmatmul.f32.gmra.mxu0 %v562
        %v1270 = vpop.f32.mrf.mxu0
        %v1271 = vadd.f32 %v1206, %v1270
        %1272 = vmatmul.f32.gmra.mxu0 %v566
        %v1273 = vpop.f32.mrf.mxu0
        %v1274 = vadd.f32 %v1209, %v1273
        %1275 = vmatmul.f32.gmra.mxu0 %v570
        %v1276 = vpop.f32.mrf.mxu0
        %v1277 = vadd.f32 %v1212, %v1276
        %1278 = vmatmul.f32.gmra.mxu0 %v574
        %v1279 = vpop.f32.mrf.mxu0
        %v1280 = vadd.f32 %v1215, %v1279
        %1281 = vmatmul.f32.gmra.mxu0 %v578
        %v1282 = vpop.f32.mrf.mxu0
        %v1283 = vadd.f32 %v1218, %v1282
        %1284 = vmatmul.f32.gmra.mxu0 %v582
        %v1285 = vpop.f32.mrf.mxu0
        %v1286 = vadd.f32 %v1221, %v1285
        %1287 = vmatmul.f32.gmra.mxu0 %v586
        %v1288 = vpop.f32.mrf.mxu0
        %v1289 = vadd.f32 %v1224, %v1288
        %1290 = vmatmul.f32.gmra.mxu0 %v590
        %v1291 = vpop.f32.mrf.mxu0
        %v1292 = vadd.f32 %v1227, %v1291
        %1293 = vmatmul.f32.gmra.mxu0 %v594
        %v1294 = vpop.f32.mrf.mxu0
        %v1295 = vadd.f32 %v1230, %v1294
        %1296 = vmatmul.f32.gmra.mxu0 %v598
        %v1297 = vpop.f32.mrf.mxu0
        %v1298 = vadd.f32 %v1233, %v1297
        %1299 = vmatmul.f32.gmra.mxu0 %v602
        %v1300 = vpop.f32.mrf.mxu0
        %v1301 = vadd.f32 %v1236, %v1300
        %1302 = vmatmul.f32.gmra.mxu0 %v606
        %v1303 = vpop.f32.mrf.mxu0
        %v1304 = vadd.f32 %v1239, %v1303
        %1305 = vmatmul.f32.gmra.mxu0 %v610
        %v1306 = vpop.f32.mrf.mxu0
        %v1307 = vadd.f32 %v1242, %v1306
        %1308 = vdwg.mxu0
        %1309 = vmatpush.msra.mxu0 %v708
        %1310 = vmatpush.msra.mxu0 %v706
        %1311 = vmatpush.msra.mxu0 %v704
        %1312 = vmatpush.msra.mxu0 %v702
        %1313 = vmatpush.msra.mxu0 %v700
        %1314 = vmatpush.msra.mxu0 %v698
        %1315 = vmatpush.msra.mxu0 %v696
        %1316 = vmatpush.msra.mxu0 %v694
        %1317 = vmatpush.msra.mxu0 %v692
        %1318 = vmatpush.msra.mxu0 %v690
        %1319 = vmatpush.msra.mxu0 %v688
        %1320 = vmatpush.msra.mxu0 %v686
        %1321 = vmatpush.msra.mxu0 %v684
        %1322 = vmatpush.msra.mxu0 %v682
        %1323 = vmatpush.msra.mxu0 %v680
        %1324 = vmatpush.msra.mxu0 %v678
        %1325 = vmatmul.f32.gmra.mxu0 %v551
        %v1326 = vpop.f32.mrf.mxu0
        %v1327 = vadd.f32 %v1262, %v1326
        %1328 = vmatmul.f32.gmra.mxu0 %v555
        %v1329 = vpop.f32.mrf.mxu0
        %v1330 = vadd.f32 %v1265, %v1329
        %1331 = vmatmul.f32.gmra.mxu0 %v559
        %v1332 = vpop.f32.mrf.mxu0
        %v1333 = vadd.f32 %v1268, %v1332
        %1334 = vmatmul.f32.gmra.mxu0 %v563
        %v1335 = vpop.f32.mrf.mxu0
        %v1336 = vadd.f32 %v1271, %v1335
        %1337 = vmatmul.f32.gmra.mxu0 %v567
        %v1338 = vpop.f32.mrf.mxu0
        %v1339 = vadd.f32 %v1274, %v1338
        %1340 = vmatmul.f32.gmra.mxu0 %v571
        %v1341 = vpop.f32.mrf.mxu0
        %v1342 = vadd.f32 %v1277, %v1341
        %1343 = vmatmul.f32.gmra.mxu0 %v575
        %v1344 = vpop.f32.mrf.mxu0
        %v1345 = vadd.f32 %v1280, %v1344
        %1346 = vmatmul.f32.gmra.mxu0 %v579
        %v1347 = vpop.f32.mrf.mxu0
        %v1348 = vadd.f32 %v1283, %v1347
        %1349 = vmatmul.f32.gmra.mxu0 %v583
        %v1350 = vpop.f32.mrf.mxu0
        %v1351 = vadd.f32 %v1286, %v1350
        %1352 = vmatmul.f32.gmra.mxu0 %v587
        %v1353 = vpop.f32.mrf.mxu0
        %v1354 = vadd.f32 %v1289, %v1353
        %1355 = vmatmul.f32.gmra.mxu0 %v591
        %v1356 = vpop.f32.mrf.mxu0
        %v1357 = vadd.f32 %v1292, %v1356
        %1358 = vmatmul.f32.gmra.mxu0 %v595
        %v1359 = vpop.f32.mrf.mxu0
        %v1360 = vadd.f32 %v1295, %v1359
        %1361 = vmatmul.f32.gmra.mxu0 %v599
        %v1362 = vpop.f32.mrf.mxu0
        %v1363 = vadd.f32 %v1298, %v1362
        %1364 = vmatmul.f32.gmra.mxu0 %v603
        %v1365 = vpop.f32.mrf.mxu0
        %v1366 = vadd.f32 %v1301, %v1365
        %1367 = vmatmul.f32.gmra.mxu0 %v607
        %v1368 = vpop.f32.mrf.mxu0
        %v1369 = vadd.f32 %v1304, %v1368
        %1370 = vmatmul.f32.gmra.mxu0 %v611
        %v1371 = vpop.f32.mrf.mxu0
        %v1372 = vadd.f32 %v1307, %v1371
        %1373 = vdwg.mxu0
        %1374 = vmatpush.msra.mxu0 %v740
        %1375 = vmatpush.msra.mxu0 %v738
        %1376 = vmatpush.msra.mxu0 %v736
        %1377 = vmatpush.msra.mxu0 %v734
        %1378 = vmatpush.msra.mxu0 %v732
        %1379 = vmatpush.msra.mxu0 %v730
        %1380 = vmatpush.msra.mxu0 %v728
        %1381 = vmatpush.msra.mxu0 %v726
        %1382 = vmatpush.msra.mxu0 %v724
        %1383 = vmatpush.msra.mxu0 %v722
        %1384 = vmatpush.msra.mxu0 %v720
        %1385 = vmatpush.msra.mxu0 %v718
        %1386 = vmatpush.msra.mxu0 %v716
        %1387 = vmatpush.msra.mxu0 %v714
        %1388 = vmatpush.msra.mxu0 %v712
        %1389 = vmatpush.msra.mxu0 %v710
        %1390 = vmatmul.f32.gmra.mxu0 %v552
        %v1391 = vpop.f32.mrf.mxu0
        %v1392 = vadd.f32 %v1327, %v1391
        %1393 = vmatmul.f32.gmra.mxu0 %v556
        %v1394 = vpop.f32.mrf.mxu0
        %v1395 = vadd.f32 %v1330, %v1394
        %1396 = vmatmul.f32.gmra.mxu0 %v560
        %v1397 = vpop.f32.mrf.mxu0
        %v1398 = vadd.f32 %v1333, %v1397
        %1399 = vmatmul.f32.gmra.mxu0 %v564
        %v1400 = vpop.f32.mrf.mxu0
        %v1401 = vadd.f32 %v1336, %v1400
        %1402 = vmatmul.f32.gmra.mxu0 %v568
        %v1403 = vpop.f32.mrf.mxu0
        %v1404 = vadd.f32 %v1339, %v1403
        %1405 = vmatmul.f32.gmra.mxu0 %v572
        %v1406 = vpop.f32.mrf.mxu0
        %v1407 = vadd.f32 %v1342, %v1406
        %1408 = vmatmul.f32.gmra.mxu0 %v576
        %v1409 = vpop.f32.mrf.mxu0
        %v1410 = vadd.f32 %v1345, %v1409
        %1411 = vmatmul.f32.gmra.mxu0 %v580
        %v1412 = vpop.f32.mrf.mxu0
        %v1413 = vadd.f32 %v1348, %v1412
        %1414 = vmatmul.f32.gmra.mxu0 %v584
        %v1415 = vpop.f32.mrf.mxu0
        %v1416 = vadd.f32 %v1351, %v1415
        %1417 = vmatmul.f32.gmra.mxu0 %v588
        %v1418 = vpop.f32.mrf.mxu0
        %v1419 = vadd.f32 %v1354, %v1418
        %1420 = vmatmul.f32.gmra.mxu0 %v592
        %v1421 = vpop.f32.mrf.mxu0
        %v1422 = vadd.f32 %v1357, %v1421
        %1423 = vmatmul.f32.gmra.mxu0 %v596
        %v1424 = vpop.f32.mrf.mxu0
        %v1425 = vadd.f32 %v1360, %v1424
        %1426 = vmatmul.f32.gmra.mxu0 %v600
        %v1427 = vpop.f32.mrf.mxu0
        %v1428 = vadd.f32 %v1363, %v1427
        %1429 = vmatmul.f32.gmra.mxu0 %v604
        %v1430 = vpop.f32.mrf.mxu0
        %v1431 = vadd.f32 %v1366, %v1430
        %1432 = vmatmul.f32.gmra.mxu0 %v608
        %v1433 = vpop.f32.mrf.mxu0
        %v1434 = vadd.f32 %v1369, %v1433
        %1435 = vmatmul.f32.gmra.mxu0 %v612
        %v1436 = vpop.f32.mrf.mxu0
        %v1437 = vadd.f32 %v1372, %v1436
        %1438 = vdwg.mxu0
        %v1439 = vld [vmem:[%s4] sm:$0x3]
        %v1441 = vperm.slane %v1439, 0
        %v1442 = vperm.slane %v1439, 1
        %v1445 = vadd.f32 %v1132, %v1441
        %v1446 = vadd.f32 %v1392, %v1442
        %v1447 = vadd.f32 %v1135, %v1441
        %v1448 = vadd.f32 %v1395, %v1442
        %v1449 = vadd.f32 %v1138, %v1441
        %v1450 = vadd.f32 %v1398, %v1442
        %v1451 = vadd.f32 %v1141, %v1441
        %v1452 = vadd.f32 %v1401, %v1442
        %v1453 = vadd.f32 %v1144, %v1441
        %v1454 = vadd.f32 %v1404, %v1442
        %v1455 = vadd.f32 %v1147, %v1441
        %v1456 = vadd.f32 %v1407, %v1442
        %v1457 = vadd.f32 %v1150, %v1441
        %v1458 = vadd.f32 %v1410, %v1442
        %v1459 = vadd.f32 %v1153, %v1441
        %v1460 = vadd.f32 %v1413, %v1442
        %v1461 = vadd.f32 %v1156, %v1441
        %v1462 = vadd.f32 %v1416, %v1442
        %v1463 = vadd.f32 %v1159, %v1441
        %v1464 = vadd.f32 %v1419, %v1442
        %v1465 = vadd.f32 %v1162, %v1441
        %v1466 = vadd.f32 %v1422, %v1442
        %v1467 = vadd.f32 %v1165, %v1441
        %v1468 = vadd.f32 %v1425, %v1442
        %v1469 = vadd.f32 %v1168, %v1441
        %v1470 = vadd.f32 %v1428, %v1442
        %v1471 = vadd.f32 %v1171, %v1441
        %v1472 = vadd.f32 %v1431, %v1442
        %v1473 = vadd.f32 %v1174, %v1441
        %v1474 = vadd.f32 %v1434, %v1442
        %v1475 = vadd.f32 %v1177, %v1441
        %v1476 = vadd.f32 %v1437, %v1442
        %v1477 = vmax.f32 %v1445, 0.0
        %v1478 = vmax.f32 %v1446, 0.0
        %v1479 = vmax.f32 %v1447, 0.0
        %v1480 = vmax.f32 %v1448, 0.0
        %v1481 = vmax.f32 %v1449, 0.0
        %v1482 = vmax.f32 %v1450, 0.0
        %v1483 = vmax.f32 %v1451, 0.0
        %v1484 = vmax.f32 %v1452, 0.0
        %v1485 = vmax.f32 %v1453, 0.0
        %v1486 = vmax.f32 %v1454, 0.0
        %v1487 = vmax.f32 %v1455, 0.0
        %v1488 = vmax.f32 %v1456, 0.0
        %v1489 = vmax.f32 %v1457, 0.0
        %v1490 = vmax.f32 %v1458, 0.0
        %v1491 = vmax.f32 %v1459, 0.0
        %v1492 = vmax.f32 %v1460, 0.0
        %v1493 = vmax.f32 %v1461, 0.0
        %v1494 = vmax.f32 %v1462, 0.0
        %v1495 = vmax.f32 %v1463, 0.0
        %v1496 = vmax.f32 %v1464, 0.0
        %v1497 = vmax.f32 %v1465, 0.0
        %v1498 = vmax.f32 %v1466, 0.0
        %v1499 = vmax.f32 %v1467, 0.0
        %v1500 = vmax.f32 %v1468, 0.0
        %v1501 = vmax.f32 %v1469, 0.0
        %v1502 = vmax.f32 %v1470, 0.0
        %v1503 = vmax.f32 %v1471, 0.0
        %v1504 = vmax.f32 %v1472, 0.0
        %v1505 = vmax.f32 %v1473, 0.0
        %v1506 = vmax.f32 %v1474, 0.0
        %v1507 = vmax.f32 %v1475, 0.0
        %v1508 = vmax.f32 %v1476, 0.0
        %v1509 = vld [vmem:[#allocation7] sm:$0xff]
        %v1510 = vld [vmem:[#allocation7 + $0x8] sm:$0xff]
        %v1511 = vld [vmem:[#allocation7 + $0x10] sm:$0xff]
        %v1512 = vld [vmem:[#allocation7 + $0x18] sm:$0xff]
        %v1513 = vld [vmem:[#allocation7 + $0x20] sm:$0xff]
        %v1514 = vld [vmem:[#allocation7 + $0x28] sm:$0xff]
        %v1515 = vld [vmem:[#allocation7 + $0x30] sm:$0xff]
        %v1516 = vld [vmem:[#allocation7 + $0x38] sm:$0xff]
        %v1517 = vld [vmem:[#allocation7 + $0x40] sm:$0xff]
        %v1518 = vld [vmem:[#allocation7 + $0x48] sm:$0xff]
        %v1519 = vld [vmem:[#allocation7 + $0x50] sm:$0xff]
        %v1520 = vld [vmem:[#allocation7 + $0x58] sm:$0xff]
        %v1521 = vld [vmem:[#allocation7 + $0x60] sm:$0xff]
        %v1522 = vld [vmem:[#allocation7 + $0x68] sm:$0xff]
        %v1523 = vld [vmem:[#allocation7 + $0x70] sm:$0xff]
        %v1524 = vld [vmem:[#allocation7 + $0x78] sm:$0xff]
        %v1525 = vld [vmem:[#allocation7 + $0x80] sm:$0xff]
        %v1526 = vld [vmem:[#allocation7 + $0x88] sm:$0xff]
        %v1527 = vld [vmem:[#allocation7 + $0x90] sm:$0xff]
        %v1528 = vld [vmem:[#allocation7 + $0x98] sm:$0xff]
        %v1529 = vld [vmem:[#allocation7 + $0xa0] sm:$0xff]
        %v1530 = vld [vmem:[#allocation7 + $0xa8] sm:$0xff]
        %v1531 = vld [vmem:[#allocation7 + $0xb0] sm:$0xff]
        %v1532 = vld [vmem:[#allocation7 + $0xb8] sm:$0xff]
        %v1533 = vld [vmem:[#allocation7 + $0xc0] sm:$0xff]
        %v1534 = vld [vmem:[#allocation7 + $0xc8] sm:$0xff]
        %v1535 = vld [vmem:[#allocation7 + $0xd0] sm:$0xff]
        %v1536 = vld [vmem:[#allocation7 + $0xd8] sm:$0xff]
        %v1537 = vld [vmem:[#allocation7 + $0xe0] sm:$0xff]
        %v1538 = vld [vmem:[#allocation7 + $0xe8] sm:$0xff]
        %v1539 = vld [vmem:[#allocation7 + $0xf0] sm:$0xff]
        %v1540 = vld [vmem:[#allocation7 + $0xf8] sm:$0xff]
        %v1541 = vld [vmem:[%s6] sm:$0x1]
        %v1543 = vperm.slane %v1541, 0
        %1545 = vmatpush.msra.mxu0 %v1524
        %1546 = vmatpush.msra.mxu0 %v1523
        %1547 = vmatpush.msra.mxu0 %v1522
        %1548 = vmatpush.msra.mxu0 %v1521
        %1549 = vmatpush.msra.mxu0 %v1520
        %1550 = vmatpush.msra.mxu0 %v1519
        %1551 = vmatpush.msra.mxu0 %v1518
        %1552 = vmatpush.msra.mxu0 %v1517
        %1553 = vmatpush.msra.mxu0 %v1516
        %1554 = vmatpush.msra.mxu0 %v1515
        %1555 = vmatpush.msra.mxu0 %v1514
        %1556 = vmatpush.msra.mxu0 %v1513
        %1557 = vmatpush.msra.mxu0 %v1512
        %1558 = vmatpush.msra.mxu0 %v1511
        %1559 = vmatpush.msra.mxu0 %v1510
        %1560 = vmatpush.msra.mxu0 %v1509
        %1561 = vmatmul.f32.gmra.mxu0 %v1477
        %v1562 = vpop.f32.mrf.mxu0
        %v1563 = vadd.f32 %v1543, %v1562
        %1564 = vmatmul.f32.gmra.mxu0 %v1479
        %v1565 = vpop.f32.mrf.mxu0
        %v1566 = vadd.f32 %v1543, %v1565
        %1567 = vmatmul.f32.gmra.mxu0 %v1481
        %v1568 = vpop.f32.mrf.mxu0
        %v1569 = vadd.f32 %v1543, %v1568
        %1570 = vmatmul.f32.gmra.mxu0 %v1483
        %v1571 = vpop.f32.mrf.mxu0
        %v1572 = vadd.f32 %v1543, %v1571
        %1573 = vmatmul.f32.gmra.mxu0 %v1485
        %v1574 = vpop.f32.mrf.mxu0
        %v1575 = vadd.f32 %v1543, %v1574
        %1576 = vmatmul.f32.gmra.mxu0 %v1487
        %v1577 = vpop.f32.mrf.mxu0
        %v1578 = vadd.f32 %v1543, %v1577
        %1579 = vmatmul.f32.gmra.mxu0 %v1489
        %v1580 = vpop.f32.mrf.mxu0
        %v1581 = vadd.f32 %v1543, %v1580
        %1582 = vmatmul.f32.gmra.mxu0 %v1491
        %v1583 = vpop.f32.mrf.mxu0
        %v1584 = vadd.f32 %v1543, %v1583
        %1585 = vmatmul.f32.gmra.mxu0 %v1493
        %v1586 = vpop.f32.mrf.mxu0
        %v1587 = vadd.f32 %v1543, %v1586
        %1588 = vmatmul.f32.gmra.mxu0 %v1495
        %v1589 = vpop.f32.mrf.mxu0
        %v1590 = vadd.f32 %v1543, %v1589
        %1591 = vmatmul.f32.gmra.mxu0 %v1497
        %v1592 = vpop.f32.mrf.mxu0
        %v1593 = vadd.f32 %v1543, %v1592
        %1594 = vmatmul.f32.gmra.mxu0 %v1499
        %v1595 = vpop.f32.mrf.mxu0
        %v1596 = vadd.f32 %v1543, %v1595
        %1597 = vmatmul.f32.gmra.mxu0 %v1501
        %v1598 = vpop.f32.mrf.mxu0
        %v1599 = vadd.f32 %v1543, %v1598
        %1600 = vmatmul.f32.gmra.mxu0 %v1503
        %v1601 = vpop.f32.mrf.mxu0
        %v1602 = vadd.f32 %v1543, %v1601
        %1603 = vmatmul.f32.gmra.mxu0 %v1505
        %v1604 = vpop.f32.mrf.mxu0
        %v1605 = vadd.f32 %v1543, %v1604
        %1606 = vmatmul.f32.gmra.mxu0 %v1507
        %v1607 = vpop.f32.mrf.mxu0
        %v1608 = vadd.f32 %v1543, %v1607
        %1609 = vdwg.mxu0
        %1610 = vmatpush.msra.mxu0 %v1540
        %1611 = vmatpush.msra.mxu0 %v1539
        %1612 = vmatpush.msra.mxu0 %v1538
        %1613 = vmatpush.msra.mxu0 %v1537
        %1614 = vmatpush.msra.mxu0 %v1536
        %1615 = vmatpush.msra.mxu0 %v1535
        %1616 = vmatpush.msra.mxu0 %v1534
        %1617 = vmatpush.msra.mxu0 %v1533
        %1618 = vmatpush.msra.mxu0 %v1532
        %1619 = vmatpush.msra.mxu0 %v1531
        %1620 = vmatpush.msra.mxu0 %v1530
        %1621 = vmatpush.msra.mxu0 %v1529
        %1622 = vmatpush.msra.mxu0 %v1528
        %1623 = vmatpush.msra.mxu0 %v1527
        %1624 = vmatpush.msra.mxu0 %v1526
        %1625 = vmatpush.msra.mxu0 %v1525
        %1626 = vmatmul.f32.gmra.mxu0 %v1478
        %v1627 = vpop.f32.mrf.mxu0
        %v1628 = vadd.f32 %v1563, %v1627
        %1629 = vmatmul.f32.gmra.mxu0 %v1480
        %v1630 = vpop.f32.mrf.mxu0
        %v1631 = vadd.f32 %v1566, %v1630
        %1632 = vmatmul.f32.gmra.mxu0 %v1482
        %v1633 = vpop.f32.mrf.mxu0
        %v1634 = vadd.f32 %v1569, %v1633
        %1635 = vmatmul.f32.gmra.mxu0 %v1484
        %v1636 = vpop.f32.mrf.mxu0
        %v1637 = vadd.f32 %v1572, %v1636
        %1638 = vmatmul.f32.gmra.mxu0 %v1486
        %v1639 = vpop.f32.mrf.mxu0
        %v1640 = vadd.f32 %v1575, %v1639
        %1641 = vmatmul.f32.gmra.mxu0 %v1488
        %v1642 = vpop.f32.mrf.mxu0
        %v1643 = vadd.f32 %v1578, %v1642
        %1644 = vmatmul.f32.gmra.mxu0 %v1490
        %v1645 = vpop.f32.mrf.mxu0
        %v1646 = vadd.f32 %v1581, %v1645
        %1647 = vmatmul.f32.gmra.mxu0 %v1492
        %v1648 = vpop.f32.mrf.mxu0
        %v1649 = vadd.f32 %v1584, %v1648
        %1650 = vmatmul.f32.gmra.mxu0 %v1494
        %v1651 = vpop.f32.mrf.mxu0
        %v1652 = vadd.f32 %v1587, %v1651
        %1653 = vmatmul.f32.gmra.mxu0 %v1496
        %v1654 = vpop.f32.mrf.mxu0
        %v1655 = vadd.f32 %v1590, %v1654
        %1656 = vmatmul.f32.gmra.mxu0 %v1498
        %v1657 = vpop.f32.mrf.mxu0
        %v1658 = vadd.f32 %v1593, %v1657
        %1659 = vmatmul.f32.gmra.mxu0 %v1500
        %v1660 = vpop.f32.mrf.mxu0
        %v1661 = vadd.f32 %v1596, %v1660
        %1662 = vmatmul.f32.gmra.mxu0 %v1502
        %v1663 = vpop.f32.mrf.mxu0
        %v1664 = vadd.f32 %v1599, %v1663
        %1665 = vmatmul.f32.gmra.mxu0 %v1504
        %v1666 = vpop.f32.mrf.mxu0
        %v1667 = vadd.f32 %v1602, %v1666
        %1668 = vmatmul.f32.gmra.mxu0 %v1506
        %v1669 = vpop.f32.mrf.mxu0
        %v1670 = vadd.f32 %v1605, %v1669
        %1671 = vmatmul.f32.gmra.mxu0 %v1508
        %v1672 = vpop.f32.mrf.mxu0
        %v1673 = vadd.f32 %v1608, %v1672
        %1674 = vdwg.mxu0
        %1675 = vst [vmem:[%s338] sm:$0xff] %v1628
        %1676 = vst [vmem:[%s338 + $0x8] sm:$0xff] %v1631
        %1677 = vst [vmem:[%s338 + $0x10] sm:$0xff] %v1634
        %1678 = vst [vmem:[%s338 + $0x18] sm:$0xff] %v1637
        %1679 = vst [vmem:[%s338 + $0x20] sm:$0xff] %v1640
        %1680 = vst [vmem:[%s338 + $0x28] sm:$0xff] %v1643
        %1681 = vst [vmem:[%s338 + $0x30] sm:$0xff] %v1646
        %1682 = vst [vmem:[%s338 + $0x38] sm:$0xff] %v1649
        %1683 = vst [vmem:[%s338 + $0x40] sm:$0xff] %v1652
        %1684 = vst [vmem:[%s338 + $0x48] sm:$0xff] %v1655
        %1685 = vst [vmem:[%s338 + $0x50] sm:$0xff] %v1658
        %1686 = vst [vmem:[%s338 + $0x58] sm:$0xff] %v1661
        %1687 = vst [vmem:[%s338 + $0x60] sm:$0xff] %v1664
        %1688 = vst [vmem:[%s338 + $0x68] sm:$0xff] %v1667
        %1689 = vst [vmem:[%s338 + $0x70] sm:$0xff] %v1670
        %1690 = vst [vmem:[%s338 + $0x78] sm:$0xff] %v1673
        %s1691 = sand.u32 %s188, 1
        %s1692 = scalar_lea.sflag [#allocation4], %s1691
        %s1693 = sand.u32 %s188, 1
        %s1694 = smul.addr %s1693, 128
        %s1695 = scalar_lea.vmem [#allocation8], %s1694
        // Predicated region
        $region61: #{tpu_custom_call.1} parent=47 // pred_check
          %p1696 = pneg %p198
        $region62: #{tpu_custom_call.1} parent=47 // pred_check_branch
          %1698 = sbr.rel (%p1696) target = $region64
        $region63: #{tpu_custom_call.1} parent=47 // pred_region
          %s1699 = smul.u32 16, %s23
          %1701 = vsyncadd %s1692, 0
          %s1702 = smul.addr %s1699, 8
          %s1703 = scalar_lea.hbm %s7, %s1702
          %s1704 = sshll.u32 %s1695, 4
          %s1705 = int_to_ptr.vmem [resolvable:$true] %s1704
          %s1706 = sshll.u32 %s1703, 4
          %s1707 = int_to_ptr.hbm [resolvable:$true] %s1706
          %1712 = dma.vmem_to_hbm [thread:$0]  %s1705, 2048, %s1707, %s1692, 128, 128, 8
        $region64: #{tpu_custom_call.1} parent=47 // pred_fallthru
          _
      $region48: #{tpu_custom_call.1} parent=5 // pred_fallthru
        _
      %p1713 = scmp.le.s32.totalorder 2, %s18
      // Predicated region
      $region65: #{tpu_custom_call.1} parent=5 // pred_check
        %p1714 = pneg %p1713
      $region66: #{tpu_custom_call.1} parent=5 // pred_check_branch
        %1716 = sbr.rel (%p1714) target = $region68
      $region67: #{tpu_custom_call.1} parent=5 // pred_region
        %s1717 = ssub.s32 %s18, 2
        // Predicated region
        $region69: #{tpu_custom_call.1} parent=67 // pred_check
          %p1718 = pneg %p204
        $region70: #{tpu_custom_call.1} parent=67 // pred_check_branch
          %1720 = sbr.rel (%p1718) target = $region72
        $region71: #{tpu_custom_call.1} parent=67 // pred_region
          %s1721 = sand.u32 %s189, 1
          %s1722 = scalar_lea.sflag [#allocation4], %s1721
          %s1723 = sand.u32 %s189, 1
          %s1724 = smul.addr %s1723, 128
          %s1725 = scalar_lea.vmem [#allocation8], %s1724
          %1727 = dma.done %s1722, 2048
        $region72: #{tpu_custom_call.1} parent=67 // pred_fallthru
          _
      $region68: #{tpu_custom_call.1} parent=5 // pred_fallthru
        _
    $region6: #{tpu_custom_call.1} parent=1 // loop_footer
      %s22 = sadd.s32 1, %s18
    $region7: #{tpu_custom_call.1} parent=1 // loop_footer_branch
      %17 = sbr.rel target = $region3
    $region8: #{tpu_custom_call.1} parent=1 // loop_exit
      _
    %1728 = vsyncpa [#allocation3], 1
    %s1729 = scalar_lea.sflag [#allocation3], 1
    %1730 = vsyncpa %s1729, 1
    %1731 = vsyncpa [#allocation6], 1
    %1732 = vsyncpa [#allocation4], 1
    %s1733 = scalar_lea.sflag [#allocation4], 1
    %1734 = vsyncpa %s1733, 1

</llo_original>
